<compile_context>
chip_gen: v7x
topology: tpu7x:2x2x1
jax: 0.10.0
libtpu: 0.0.40
codegen_flags: <defaults>
</compile_context>

<pallas_src>
import functools

import numpy as np
import jax
import jax.numpy as jnp
from jax.experimental import pallas as pl
from jax.experimental.pallas import tpu as pltpu

BN_EPS = 1e-5


# ----------------------------------------------------------------------------
# Trace-time helpers (tiny, numpy)
# ----------------------------------------------------------------------------
def _bilinear_matrix(n_in, n_out):
    """Interpolation matrix (n_out, n_in), bilinear, align_corners=True."""
    U = np.zeros((n_out, n_in), dtype=np.float32)
    if n_out == 1 or n_in == 1:
        U[:, 0] = 1.0
        return U
    scale = (n_in - 1) / (n_out - 1)
    for i in range(n_out):
        src = i * scale
        i0 = min(int(np.floor(src)), n_in - 1)
        i1 = min(i0 + 1, n_in - 1)
        f = src - i0
        U[i, i0] += 1.0 - f
        U[i, i1] += f
    return U


def prepare_params(params, *, dec_hw, enc_hw, mxu_dtype=jnp.bfloat16):
    """One-time (model-load-time) prep, hoisted out of the jitted forward:
    fold inference-mode BN into the conv weights, reshape weights to the
    im2col (K = 9*Cin) layout, and build the kron'd upsample+pad matrix."""
    Hd, Wd = dec_hw
    He, We = enc_hw
    Hu, Wu = 2 * Hd, 2 * Wd
    diffY, diffX = (He - Hu) // 2, (We - Wu) // 2
    # The module pads by diff//2 on both sides; odd size differences do not
    # type-check in the PyTorch module either (torch.cat would fail).
    assert He == Hu + 2 * diffY and We == Wu + 2 * diffX

    w1, w2 = params["w1"], params["w2"]
    M1, Cin = w1.shape[0], w1.shape[1]
    Cout = w2.shape[0]
    assert w2.shape[1] == M1

    s1 = params["g1"] / jnp.sqrt(params["v1"] + BN_EPS)
    s2 = params["g2"] / jnp.sqrt(params["v2"] + BN_EPS)
    b1 = (params["b1"] - params["m1"] * s1).astype(jnp.float32).reshape(M1, 1)
    b2 = (params["b2"] - params["m2"] * s2).astype(jnp.float32).reshape(Cout, 1)
    w1f = w1 * s1[:, None, None, None]            # BN scale folded into weights
    w2f = w2 * s2[:, None, None, None]
    # (Cout, Cin, 3, 3) -> (Cout, 9*Cin); column (3*dy+dx)*Cin + ci matches the
    # kernel's tap/stack order (input channel order = [encoder, decoder]).
    w1_m = jnp.transpose(w1f, (0, 2, 3, 1)).reshape(M1, 9 * Cin).astype(mxu_dtype)
    w2_m = jnp.transpose(w2f, (0, 2, 3, 1)).reshape(Cout, 9 * M1).astype(mxu_dtype)

    # bilinear x2 (align_corners=True) + F.pad folded into ONE matrix:
    #   dpad[c, h*We + w] = sum_{hd,wd} dec[c, hd*Wd + wd] * Uh[h,hd] * Uw[w,wd]
    uh = np.pad(_bilinear_matrix(Hd, Hu), ((diffY, diffY), (0, 0)))   # (He, Hd)
    uw = np.pad(_bilinear_matrix(Wd, Wu), ((diffX, diffX), (0, 0)))   # (We, Wd)
    u2 = jnp.asarray(np.kron(uh, uw).T, mxu_dtype)                    # (Hd*Wd, He*We)
    return {"u2": u2, "w1": w1_m, "b1": b1, "w2": w2_m, "b2": b2}


# ----------------------------------------------------------------------------
# Fused UpConv kernel: one grid step processes the whole (small) batch
# ----------------------------------------------------------------------------
def _upconv_fused_kernel(dec_ref, enc_ref, u2_ref, w1_ref, b1_ref, w2_ref,
                         b2_ref, o_ref, *, wp: int):
    f32 = jnp.float32
    n_batch = dec_ref.shape[0]
    L = enc_ref.shape[2]                       # Hp * Wp  (full padded grid)

    u2 = u2_ref[...]                           # (Hd*Wd, L)   MXU dtype
    w1 = w1_ref[...]                           # (M1, 9*Cin)  MXU dtype
    w2 = w2_ref[...]                           # (Cout, 9*M1) MXU dtype
    b1 = b1_ref[...]                           # (M1, 1)      f32
    b2 = b2_ref[...]                           # (Cout, 1)    f32
    mxu = u2.dtype

    # 3x3 taps on the flattened full grid: tap (dy, dx) reads x[:, f + dy*wp + dx].
    offs = tuple(dy * wp + dx for dy in range(3) for dx in range(3))
    ext = offs[-1]                             # 2*wp + 2

    def im2col(x):
        # One zero-extension, then 9 static lane-offset slices stacked on the
        # sublane axis -> a single lane-dense 2-D (9*C, L) RHS for ONE big-K
        # matmul.  Grid positions whose window crosses the right/bottom edge
        # read the extension / the next row and are garbage; they never feed a
        # valid output (the wrapper slices the valid window at the end).
        xe = jnp.concatenate([x, jnp.zeros((x.shape[0], ext), x.dtype)], axis=1)
        return jnp.concatenate([xe[:, o:o + L] for o in offs], axis=0)

    def matmul(a, b):                          # (M, K) @ (K, L) -> (M, L), f32 acc
        return jax.lax.dot_general(a, b, (((1,), (0,)), ((), ())),
                                   preferred_element_type=f32)

    for i in range(n_batch):                   # batch folded into one grid step
        # f32 HBM blocks -> MXU dtype on the VPU (no wrapper-side cast pass).
        dec = dec_ref[i].astype(mxu)           # (Cd, Hd*Wd)
        enc = enc_ref[i].astype(mxu)           # (Ce, L)

        # 1) bilinear x2 (align_corners=True) + F.pad as ONE matmul with the
        #    precomputed kron(Uh_pad, Uw_pad); single recast afterwards.
        dpad = matmul(dec, u2).astype(mxu)     # (Cd, L)

        # 2) channel concat (never leaves VMEM) + conv1 + folded BN + ReLU(f32).
        x = jnp.concatenate([enc, dpad], axis=0)            # (Cin, L)
        h1 = jnp.maximum(matmul(w1, im2col(x)) + b1, 0.0)
        h1 = h1.astype(mxu)                                  # (M1, L)

        # 3) conv2 + folded BN + ReLU, still on the full grid; lane-dense store.
        y = jnp.maximum(matmul(w2, im2col(h1)) + b2, 0.0)
        o_ref[i] = y.astype(o_ref.dtype)                     # (Cout, L)


# ----------------------------------------------------------------------------
# UpConv forward (NCHW in / NCHW out, matches the PyTorch module)
# ----------------------------------------------------------------------------
def upconv_forward(decoder_nchw, encoder_nchw, prep, *, out_dtype=jnp.float32):
    N, Cd, Hd, Wd = decoder_nchw.shape
    Ne, Ce, He, We = encoder_nchw.shape
    assert N == Ne
    L = He * We
    u2, w1_m, b1, w2_m, b2 = prep["u2"], prep["w1"], prep["b1"], prep["w2"], prep["b2"]
    M1, Cout = w1_m.shape[0], w2_m.shape[0]
    Cin = w1_m.shape[1] // 9
    assert Cin == Ce + Cd and w2_m.shape[1] == 9 * M1
    assert u2.shape == (Hd * Wd, L), "prep built for different spatial sizes"
    Ho2, Wo2 = He - 4, We - 4

    # Free, contiguous reshapes: flatten spatial into the lane axis.
    dec_flat = decoder_nchw.reshape(N, Cd, Hd * Wd)
    enc_flat = encoder_nchw.reshape(N, Ce, L)

    itm = jnp.dtype(u2.dtype).itemsize
    flops = 2 * N * L * (Cd * Hd * Wd + M1 * 9 * Cin + Cout * 9 * M1)
    bytes_accessed = (dec_flat.size * dec_flat.dtype.itemsize
                      + enc_flat.size * enc_flat.dtype.itemsize
                      + (u2.size + w1_m.size + w2_m.size) * itm
                      + (b1.size + b2.size) * 4
                      + N * Cout * L * jnp.dtype(out_dtype).itemsize)

    y_full = pl.pallas_call(
        functools.partial(_upconv_fused_kernel, wp=We),
        out_shape=jax.ShapeDtypeStruct((N, Cout, L), out_dtype),
        grid=(1,),                                   # whole batch in one step
        in_specs=[
            pl.BlockSpec((N, Cd, Hd * Wd), lambda i: (0, 0, 0)),  # decoder (f32)
            pl.BlockSpec((N, Ce, L), lambda i: (0, 0, 0)),        # encoder (f32)
            pl.BlockSpec((Hd * Wd, L), lambda i: (0, 0)),         # kron upsample+pad
            pl.BlockSpec((M1, 9 * Cin), lambda i: (0, 0)),        # w1 (im2col, BN folded)
            pl.BlockSpec((M1, 1), lambda i: (0, 0)),              # b1 (f32)
            pl.BlockSpec((Cout, 9 * M1), lambda i: (0, 0)),       # w2 (im2col, BN folded)
            pl.BlockSpec((Cout, 1), lambda i: (0, 0)),            # b2 (f32)
        ],
        out_specs=pl.BlockSpec((N, Cout, L), lambda i: (0, 0, 0)),  # lane-dense store
        compiler_params=pltpu.CompilerParams(
            dimension_semantics=("arbitrary",)),
        cost_estimate=pl.CostEstimate(flops=flops, transcendentals=0,
                                      bytes_accessed=bytes_accessed),
    )(dec_flat, enc_flat, u2, w1_m, b1, w2_m, b2)

    # Full-grid -> valid window: the reshape is metadata-only and the slice is
    # cheap layout plumbing that keeps the kernel's output stores lane-dense.
    return y_full.reshape(N, Cout, He, We)[:, :, :Ho2, :Wo2]


# ----------------------------------------------------------------------------
# Pure-JAX reference (mirrors the PyTorch forward, eval-mode BN, f32 HIGHEST)
# ----------------------------------------------------------------------------
def _ref_forward(dec, enc, params):
    Uh = jnp.asarray(_bilinear_matrix(dec.shape[2], 2 * dec.shape[2]))
    Uw = jnp.asarray(_bilinear_matrix(dec.shape[3], 2 * dec.shape[3]))
    d = jnp.einsum("oh,nchw->ncow", Uh, dec)
    d = jnp.einsum("pw,ncow->ncop", Uw, d)
    diffY = (enc.shape[2] - d.shape[2]) // 2
    diffX = (enc.shape[3] - d.shape[3]) // 2
    d = jnp.pad(d, ((0, 0), (0, 0), (diffY, diffY), (diffX, diffX)))
    x = jnp.concatenate([enc, d], axis=1)

    def conv_bn_relu(x, w, g, b, m, v):
        y = jax.lax.conv_general_dilated(
            x, w, (1, 1), "VALID",
            dimension_numbers=("NCHW", "OIHW", "NCHW"),
            precision=jax.lax.Precision.HIGHEST)
        s = g / jnp.sqrt(v + BN_EPS)
        y = y * s[None, :, None, None] + (b - m * s)[None, :, None, None]
        return jnp.maximum(y, 0.0)

    x = conv_bn_relu(x, params["w1"], params["g1"], params["b1"], params["m1"], params["v1"])
    x = conv_bn_relu(x, params["w2"], params["g2"], params["b2"], params["m2"], params["v2"])
    return x


# ----------------------------------------------------------------------------
# Main
# ----------------------------------------------------------------------------
if __name__ == "__main__":
    # UpConv(in_channels=8, out_channels=8, bilinear=True)
    #   -> DoubleConv(in=8, out=8, mid=4)
    in_ch, out_ch = 8, 8
    mid_ch = in_ch // 2
    N = 2
    dec_C, dec_HW = in_ch // 2, 8     # decoder: (2, 4, 8, 8)
    enc_C, enc_HW = in_ch // 2, 18    # encoder: (2, 4, 18, 18) -> diffY=diffX=1

    key = jax.random.PRNGKey(0)
    ks = jax.random.split(key, 12)

    decoder = jax.random.normal(ks[0], (N, dec_C, dec_HW, dec_HW), jnp.float32)
    encoder = jax.random.normal(ks[1], (N, enc_C, enc_HW, enc_HW), jnp.float32)

    params = {
        # conv1: Conv2d(in_ch, mid_ch, 3, padding='valid', bias=False) + BN
        "w1": jax.random.normal(ks[2], (mid_ch, in_ch, 3, 3), jnp.float32) * 0.1,
        "g1": 1.0 + 0.1 * jax.random.normal(ks[3], (mid_ch,), jnp.float32),
        "b1": 0.1 * jax.random.normal(ks[4], (mid_ch,), jnp.float32),
        "m1": 0.1 * jax.random.normal(ks[5], (mid_ch,), jnp.float32),
        "v1": jax.random.uniform(ks[6], (mid_ch,), jnp.float32, 0.5, 1.5),
        # conv2: Conv2d(mid_ch, out_ch, 3, padding='valid', bias=False) + BN
        "w2": jax.random.normal(ks[7], (out_ch, mid_ch, 3, 3), jnp.float32) * 0.1,
        "g2": 1.0 + 0.1 * jax.random.normal(ks[8], (out_ch,), jnp.float32),
        "b2": 0.1 * jax.random.normal(ks[9], (out_ch,), jnp.float32),
        "m2": 0.1 * jax.random.normal(ks[10], (out_ch,), jnp.float32),
        "v2": jax.random.uniform(ks[11], (out_ch,), jnp.float32, 0.5, 1.5),
    }

    ref = jax.block_until_ready(_ref_forward(decoder, encoder, params))

    # One-time (load-time) parameter prep, hoisted out of the jitted forward.
    prep_f32 = prepare_params(params, dec_hw=(dec_HW, dec_HW),
                              enc_hw=(enc_HW, enc_HW), mxu_dtype=jnp.float32)
    prep_bf16 = prepare_params(params, dec_hw=(dec_HW, dec_HW),
                               enc_hw=(enc_HW, enc_HW), mxu_dtype=jnp.bfloat16)

    run = jax.jit(upconv_forward)

    # exact (f32 MXU) path
    out_f32 = jax.block_until_ready(run(decoder, encoder, prep_f32))
    assert out_f32.shape == (N, out_ch, enc_HW - 4, enc_HW - 4), out_f32.shape
    np.testing.assert_allclose(np.asarray(out_f32), np.asarray(ref),
                               rtol=1e-2, atol=1e-2)

    # fast (bf16 MXU inputs, f32 accumulation / epilogue) path — default
    out_bf16 = jax.block_until_ready(run(decoder, encoder, prep_bf16))
    np.testing.assert_allclose(np.asarray(out_bf16), np.asarray(ref),
                               rtol=5e-2, atol=5e-2)

    print("KERNEL_OK")
</pallas_src>

<mosaic_0001>
module attributes {stable_mosaic.version = 11 : i64} {
  func.func @_upconv_fused_kernel(%arg0: i32, %arg1: memref<2x4x64xf32, #tpu.memory_space<vmem>>, %arg2: memref<2x4x324xf32, #tpu.memory_space<vmem>>, %arg3: memref<64x324xf32, #tpu.memory_space<vmem>>, %arg4: memref<4x72xf32, #tpu.memory_space<vmem>>, %arg5: memref<4x1xf32, #tpu.memory_space<vmem>>, %arg6: memref<8x36xf32, #tpu.memory_space<vmem>>, %arg7: memref<8x1xf32, #tpu.memory_space<vmem>>, %arg8: memref<2x8x324xf32, #tpu.memory_space<vmem>>) attributes {dimension_semantics = [#tpu.dimension_semantics<arbitrary>], iteration_bounds = array<i64: 1>, scalar_prefetch = 0 : i64, scratch_operands = 0 : i64, tpu.core_type = #tpu.core_type<tc>, window_params = [{pipeline_mode = #tpu.pipeline_mode<synchronous>, transform_indices = @transform_0, window_bounds = array<i64: 2, 4, 64>}, {pipeline_mode = #tpu.pipeline_mode<synchronous>, transform_indices = @transform_1, window_bounds = array<i64: 2, 4, 324>}, {pipeline_mode = #tpu.pipeline_mode<synchronous>, transform_indices = @transform_2, window_bounds = array<i64: 64, 324>}, {pipeline_mode = #tpu.pipeline_mode<synchronous>, transform_indices = @transform_3, window_bounds = array<i64: 4, 72>}, {pipeline_mode = #tpu.pipeline_mode<synchronous>, transform_indices = @transform_4, window_bounds = array<i64: 4, 1>}, {pipeline_mode = #tpu.pipeline_mode<synchronous>, transform_indices = @transform_5, window_bounds = array<i64: 8, 36>}, {pipeline_mode = #tpu.pipeline_mode<synchronous>, transform_indices = @transform_6, window_bounds = array<i64: 8, 1>}, {pipeline_mode = #tpu.pipeline_mode<synchronous>, transform_indices = @transform_7, window_bounds = array<i64: 2, 8, 324>}]} {
    %c0 = arith.constant 0 : index
    %c0_0 = arith.constant 0 : index
    %0 = vector.load %arg3[%c0, %c0_0] : memref<64x324xf32, #tpu.memory_space<vmem>>, vector<64x324xf32>
    %c0_1 = arith.constant 0 : index
    %c0_2 = arith.constant 0 : index
    %1 = vector.load %arg4[%c0_1, %c0_2] : memref<4x72xf32, #tpu.memory_space<vmem>>, vector<4x72xf32>
    %c0_3 = arith.constant 0 : index
    %c0_4 = arith.constant 0 : index
    %2 = vector.load %arg6[%c0_3, %c0_4] : memref<8x36xf32, #tpu.memory_space<vmem>>, vector<8x36xf32>
    %c0_5 = arith.constant 0 : index
    %c0_6 = arith.constant 0 : index
    %3 = vector.load %arg5[%c0_5, %c0_6] : memref<4x1xf32, #tpu.memory_space<vmem>>, vector<4x1xf32>
    %c0_7 = arith.constant 0 : index
    %c0_8 = arith.constant 0 : index
    %4 = vector.load %arg7[%c0_7, %c0_8] : memref<8x1xf32, #tpu.memory_space<vmem>>, vector<8x1xf32>
    %c0_9 = arith.constant 0 : index
    %c0_10 = arith.constant 0 : index
    %c0_11 = arith.constant 0 : index
    %5 = vector.load %arg1[%c0_9, %c0_10, %c0_11] : memref<2x4x64xf32, #tpu.memory_space<vmem>>, vector<1x4x64xf32>
    %6 = vector.shape_cast %5 : vector<1x4x64xf32> to vector<4x64xf32>
    %c0_12 = arith.constant 0 : index
    %c0_13 = arith.constant 0 : index
    %c0_14 = arith.constant 0 : index
    %7 = vector.load %arg2[%c0_12, %c0_13, %c0_14] : memref<2x4x324xf32, #tpu.memory_space<vmem>>, vector<1x4x324xf32>
    %8 = vector.shape_cast %7 : vector<1x4x324xf32> to vector<4x324xf32>
    %cst = arith.constant dense<0.000000e+00> : vector<4x324xf32>
    %9 = tpu.matmul %6, %0, %cst {dimension_numbers = #tpu.dot_dimension_numbers<[1], [0], [0], [1], [0, 0, 1, 1], [], []>} : vector<4x64xf32>, vector<64x324xf32>, vector<4x324xf32> -> vector<4x324xf32>
    %10 = tpu.concatenate %8, %9 in 0 : vector<4x324xf32>, vector<4x324xf32> -> vector<8x324xf32>
    %cst_15 = arith.constant 0.000000e+00 : f32
    %11 = vector.broadcast %cst_15 : f32 to vector<8x38xf32>
    %12 = tpu.concatenate %10, %11 in 1 : vector<8x324xf32>, vector<8x38xf32> -> vector<8x362xf32>
    %13 = vector.extract_strided_slice %12 {offsets = [0, 0], sizes = [8, 324], strides = [1, 1]} : vector<8x362xf32> to vector<8x324xf32>
    %14 = vector.extract_strided_slice %12 {offsets = [0, 1], sizes = [8, 324], strides = [1, 1]} : vector<8x362xf32> to vector<8x324xf32>
    %15 = vector.extract_strided_slice %12 {offsets = [0, 2], sizes = [8, 324], strides = [1, 1]} : vector<8x362xf32> to vector<8x324xf32>
    %16 = vector.extract_strided_slice %12 {offsets = [0, 18], sizes = [8, 324], strides = [1, 1]} : vector<8x362xf32> to vector<8x324xf32>
    %17 = vector.extract_strided_slice %12 {offsets = [0, 19], sizes = [8, 324], strides = [1, 1]} : vector<8x362xf32> to vector<8x324xf32>
    %18 = vector.extract_strided_slice %12 {offsets = [0, 20], sizes = [8, 324], strides = [1, 1]} : vector<8x362xf32> to vector<8x324xf32>
    %19 = vector.extract_strided_slice %12 {offsets = [0, 36], sizes = [8, 324], strides = [1, 1]} : vector<8x362xf32> to vector<8x324xf32>
    %20 = vector.extract_strided_slice %12 {offsets = [0, 37], sizes = [8, 324], strides = [1, 1]} : vector<8x362xf32> to vector<8x324xf32>
    %21 = vector.extract_strided_slice %12 {offsets = [0, 38], sizes = [8, 324], strides = [1, 1]} : vector<8x362xf32> to vector<8x324xf32>
    %22 = tpu.concatenate %13, %14, %15, %16, %17, %18, %19, %20, %21 in 0 : vector<8x324xf32>, vector<8x324xf32>, vector<8x324xf32>, vector<8x324xf32>, vector<8x324xf32>, vector<8x324xf32>, vector<8x324xf32>, vector<8x324xf32>, vector<8x324xf32> -> vector<72x324xf32>
    %cst_16 = arith.constant dense<0.000000e+00> : vector<4x324xf32>
    %23 = tpu.matmul %1, %22, %cst_16 {dimension_numbers = #tpu.dot_dimension_numbers<[1], [0], [0], [1], [0, 0, 1, 1], [], []>} : vector<4x72xf32>, vector<72x324xf32>, vector<4x324xf32> -> vector<4x324xf32>
    %24 = vector.broadcast %3 : vector<4x1xf32> to vector<4x324xf32>
    %25 = arith.addf %23, %24 : vector<4x324xf32>
    %cst_17 = arith.constant 0.000000e+00 : f32
    %26 = vector.broadcast %cst_17 : f32 to vector<4x324xf32>
    %27 = arith.maximumf %25, %26 : vector<4x324xf32>
    %cst_18 = arith.constant 0.000000e+00 : f32
    %28 = vector.broadcast %cst_18 : f32 to vector<4x38xf32>
    %29 = tpu.concatenate %27, %28 in 1 : vector<4x324xf32>, vector<4x38xf32> -> vector<4x362xf32>
    %30 = vector.extract_strided_slice %29 {offsets = [0, 0], sizes = [4, 324], strides = [1, 1]} : vector<4x362xf32> to vector<4x324xf32>
    %31 = vector.extract_strided_slice %29 {offsets = [0, 1], sizes = [4, 324], strides = [1, 1]} : vector<4x362xf32> to vector<4x324xf32>
    %32 = vector.extract_strided_slice %29 {offsets = [0, 2], sizes = [4, 324], strides = [1, 1]} : vector<4x362xf32> to vector<4x324xf32>
    %33 = vector.extract_strided_slice %29 {offsets = [0, 18], sizes = [4, 324], strides = [1, 1]} : vector<4x362xf32> to vector<4x324xf32>
    %34 = vector.extract_strided_slice %29 {offsets = [0, 19], sizes = [4, 324], strides = [1, 1]} : vector<4x362xf32> to vector<4x324xf32>
    %35 = vector.extract_strided_slice %29 {offsets = [0, 20], sizes = [4, 324], strides = [1, 1]} : vector<4x362xf32> to vector<4x324xf32>
    %36 = vector.extract_strided_slice %29 {offsets = [0, 36], sizes = [4, 324], strides = [1, 1]} : vector<4x362xf32> to vector<4x324xf32>
    %37 = vector.extract_strided_slice %29 {offsets = [0, 37], sizes = [4, 324], strides = [1, 1]} : vector<4x362xf32> to vector<4x324xf32>
    %38 = vector.extract_strided_slice %29 {offsets = [0, 38], sizes = [4, 324], strides = [1, 1]} : vector<4x362xf32> to vector<4x324xf32>
    %39 = tpu.concatenate %30, %31, %32, %33, %34, %35, %36, %37, %38 in 0 : vector<4x324xf32>, vector<4x324xf32>, vector<4x324xf32>, vector<4x324xf32>, vector<4x324xf32>, vector<4x324xf32>, vector<4x324xf32>, vector<4x324xf32>, vector<4x324xf32> -> vector<36x324xf32>
    %cst_19 = arith.constant dense<0.000000e+00> : vector<8x324xf32>
    %40 = tpu.matmul %2, %39, %cst_19 {dimension_numbers = #tpu.dot_dimension_numbers<[1], [0], [0], [1], [0, 0, 1, 1], [], []>} : vector<8x36xf32>, vector<36x324xf32>, vector<8x324xf32> -> vector<8x324xf32>
    %41 = vector.broadcast %4 : vector<8x1xf32> to vector<8x324xf32>
    %42 = arith.addf %40, %41 : vector<8x324xf32>
    %cst_20 = arith.constant 0.000000e+00 : f32
    %43 = vector.broadcast %cst_20 : f32 to vector<8x324xf32>
    %44 = arith.maximumf %42, %43 : vector<8x324xf32>
    %c0_21 = arith.constant 0 : index
    %c0_22 = arith.constant 0 : index
    %c0_23 = arith.constant 0 : index
    %45 = vector.load %arg8[%c0_21, %c0_22, %c0_23] : memref<2x8x324xf32, #tpu.memory_space<vmem>>, vector<1x8x324xf32>
    %46 = vector.shape_cast %45 : vector<1x8x324xf32> to vector<8x324xf32>
    %47 = vector.shape_cast %44 : vector<8x324xf32> to vector<1x8x324xf32>
    tpu.vector_store %arg8[%c0_21, %c0_22, %c0_23], %47 {strides = array<i32>} : memref<2x8x324xf32, #tpu.memory_space<vmem>>, vector<1x8x324xf32>,
    %c1 = arith.constant 1 : index
    %c0_24 = arith.constant 0 : index
    %c0_25 = arith.constant 0 : index
    %48 = vector.load %arg1[%c1, %c0_24, %c0_25] : memref<2x4x64xf32, #tpu.memory_space<vmem>>, vector<1x4x64xf32>
    %49 = vector.shape_cast %48 : vector<1x4x64xf32> to vector<4x64xf32>
    %c1_26 = arith.constant 1 : index
    %c0_27 = arith.constant 0 : index
    %c0_28 = arith.constant 0 : index
    %50 = vector.load %arg2[%c1_26, %c0_27, %c0_28] : memref<2x4x324xf32, #tpu.memory_space<vmem>>, vector<1x4x324xf32>
    %51 = vector.shape_cast %50 : vector<1x4x324xf32> to vector<4x324xf32>
    %cst_29 = arith.constant dense<0.000000e+00> : vector<4x324xf32>
    %52 = tpu.matmul %49, %0, %cst_29 {dimension_numbers = #tpu.dot_dimension_numbers<[1], [0], [0], [1], [0, 0, 1, 1], [], []>} : vector<4x64xf32>, vector<64x324xf32>, vector<4x324xf32> -> vector<4x324xf32>
    %53 = tpu.concatenate %51, %52 in 0 : vector<4x324xf32>, vector<4x324xf32> -> vector<8x324xf32>
    %cst_30 = arith.constant 0.000000e+00 : f32
    %54 = vector.broadcast %cst_30 : f32 to vector<8x38xf32>
    %55 = tpu.concatenate %53, %54 in 1 : vector<8x324xf32>, vector<8x38xf32> -> vector<8x362xf32>
    %56 = vector.extract_strided_slice %55 {offsets = [0, 0], sizes = [8, 324], strides = [1, 1]} : vector<8x362xf32> to vector<8x324xf32>
    %57 = vector.extract_strided_slice %55 {offsets = [0, 1], sizes = [8, 324], strides = [1, 1]} : vector<8x362xf32> to vector<8x324xf32>
    %58 = vector.extract_strided_slice %55 {offsets = [0, 2], sizes = [8, 324], strides = [1, 1]} : vector<8x362xf32> to vector<8x324xf32>
    %59 = vector.extract_strided_slice %55 {offsets = [0, 18], sizes = [8, 324], strides = [1, 1]} : vector<8x362xf32> to vector<8x324xf32>
    %60 = vector.extract_strided_slice %55 {offsets = [0, 19], sizes = [8, 324], strides = [1, 1]} : vector<8x362xf32> to vector<8x324xf32>
    %61 = vector.extract_strided_slice %55 {offsets = [0, 20], sizes = [8, 324], strides = [1, 1]} : vector<8x362xf32> to vector<8x324xf32>
    %62 = vector.extract_strided_slice %55 {offsets = [0, 36], sizes = [8, 324], strides = [1, 1]} : vector<8x362xf32> to vector<8x324xf32>
    %63 = vector.extract_strided_slice %55 {offsets = [0, 37], sizes = [8, 324], strides = [1, 1]} : vector<8x362xf32> to vector<8x324xf32>
    %64 = vector.extract_strided_slice %55 {offsets = [0, 38], sizes = [8, 324], strides = [1, 1]} : vector<8x362xf32> to vector<8x324xf32>
    %65 = tpu.concatenate %56, %57, %58, %59, %60, %61, %62, %63, %64 in 0 : vector<8x324xf32>, vector<8x324xf32>, vector<8x324xf32>, vector<8x324xf32>, vector<8x324xf32>, vector<8x324xf32>, vector<8x324xf32>, vector<8x324xf32>, vector<8x324xf32> -> vector<72x324xf32>
    %cst_31 = arith.constant dense<0.000000e+00> : vector<4x324xf32>
    %66 = tpu.matmul %1, %65, %cst_31 {dimension_numbers = #tpu.dot_dimension_numbers<[1], [0], [0], [1], [0, 0, 1, 1], [], []>} : vector<4x72xf32>, vector<72x324xf32>, vector<4x324xf32> -> vector<4x324xf32>
    %67 = vector.broadcast %3 : vector<4x1xf32> to vector<4x324xf32>
    %68 = arith.addf %66, %67 : vector<4x324xf32>
    %cst_32 = arith.constant 0.000000e+00 : f32
    %69 = vector.broadcast %cst_32 : f32 to vector<4x324xf32>
    %70 = arith.maximumf %68, %69 : vector<4x324xf32>
    %cst_33 = arith.constant 0.000000e+00 : f32
    %71 = vector.broadcast %cst_33 : f32 to vector<4x38xf32>
    %72 = tpu.concatenate %70, %71 in 1 : vector<4x324xf32>, vector<4x38xf32> -> vector<4x362xf32>
    %73 = vector.extract_strided_slice %72 {offsets = [0, 0], sizes = [4, 324], strides = [1, 1]} : vector<4x362xf32> to vector<4x324xf32>
    %74 = vector.extract_strided_slice %72 {offsets = [0, 1], sizes = [4, 324], strides = [1, 1]} : vector<4x362xf32> to vector<4x324xf32>
    %75 = vector.extract_strided_slice %72 {offsets = [0, 2], sizes = [4, 324], strides = [1, 1]} : vector<4x362xf32> to vector<4x324xf32>
    %76 = vector.extract_strided_slice %72 {offsets = [0, 18], sizes = [4, 324], strides = [1, 1]} : vector<4x362xf32> to vector<4x324xf32>
    %77 = vector.extract_strided_slice %72 {offsets = [0, 19], sizes = [4, 324], strides = [1, 1]} : vector<4x362xf32> to vector<4x324xf32>
    %78 = vector.extract_strided_slice %72 {offsets = [0, 20], sizes = [4, 324], strides = [1, 1]} : vector<4x362xf32> to vector<4x324xf32>
    %79 = vector.extract_strided_slice %72 {offsets = [0, 36], sizes = [4, 324], strides = [1, 1]} : vector<4x362xf32> to vector<4x324xf32>
    %80 = vector.extract_strided_slice %72 {offsets = [0, 37], sizes = [4, 324], strides = [1, 1]} : vector<4x362xf32> to vector<4x324xf32>
    %81 = vector.extract_strided_slice %72 {offsets = [0, 38], sizes = [4, 324], strides = [1, 1]} : vector<4x362xf32> to vector<4x324xf32>
    %82 = tpu.concatenate %73, %74, %75, %76, %77, %78, %79, %80, %81 in 0 : vector<4x324xf32>, vector<4x324xf32>, vector<4x324xf32>, vector<4x324xf32>, vector<4x324xf32>, vector<4x324xf32>, vector<4x324xf32>, vector<4x324xf32>, vector<4x324xf32> -> vector<36x324xf32>
    %cst_34 = arith.constant dense<0.000000e+00> : vector<8x324xf32>
    %83 = tpu.matmul %2, %82, %cst_34 {dimension_numbers = #tpu.dot_dimension_numbers<[1], [0], [0], [1], [0, 0, 1, 1], [], []>} : vector<8x36xf32>, vector<36x324xf32>, vector<8x324xf32> -> vector<8x324xf32>
    %84 = vector.broadcast %4 : vector<8x1xf32> to vector<8x324xf32>
    %85 = arith.addf %83, %84 : vector<8x324xf32>
    %cst_35 = arith.constant 0.000000e+00 : f32
    %86 = vector.broadcast %cst_35 : f32 to vector<8x324xf32>
    %87 = arith.maximumf %85, %86 : vector<8x324xf32>
    %c1_36 = arith.constant 1 : index
    %c0_37 = arith.constant 0 : index
    %c0_38 = arith.constant 0 : index
    %88 = vector.load %arg8[%c1_36, %c0_37, %c0_38] : memref<2x8x324xf32, #tpu.memory_space<vmem>>, vector<1x8x324xf32>
    %89 = vector.shape_cast %88 : vector<1x8x324xf32> to vector<8x324xf32>
    %90 = vector.shape_cast %87 : vector<8x324xf32> to vector<1x8x324xf32>
    tpu.vector_store %arg8[%c1_36, %c0_37, %c0_38], %90 {strides = array<i32>} : memref<2x8x324xf32, #tpu.memory_space<vmem>>, vector<1x8x324xf32>,
    return
  }
  func.func @transform_0(%arg0: i32) -> (i32, i32, i32) {
    %c0_i32 = arith.constant 0 : i32
    %c0_i32_0 = arith.constant 0 : i32
    %c0_i32_1 = arith.constant 0 : i32
    %c0_i32_2 = arith.constant 0 : i32
    return %c0_i32, %c0_i32_0, %c0_i32_1 : i32, i32, i32
  }
  func.func @transform_1(%arg0: i32) -> (i32, i32, i32) {
    %c0_i32 = arith.constant 0 : i32
    %c0_i32_0 = arith.constant 0 : i32
    %c0_i32_1 = arith.constant 0 : i32
    %c0_i32_2 = arith.constant 0 : i32
    return %c0_i32, %c0_i32_0, %c0_i32_1 : i32, i32, i32
  }
  func.func @transform_2(%arg0: i32) -> (i32, i32) {
    %c0_i32 = arith.constant 0 : i32
    %c0_i32_0 = arith.constant 0 : i32
    %c0_i32_1 = arith.constant 0 : i32
    return %c0_i32, %c0_i32_0 : i32, i32
  }
  func.func @transform_3(%arg0: i32) -> (i32, i32) {
    %c0_i32 = arith.constant 0 : i32
    %c0_i32_0 = arith.constant 0 : i32
    %c0_i32_1 = arith.constant 0 : i32
    return %c0_i32, %c0_i32_0 : i32, i32
  }
  func.func @transform_4(%arg0: i32) -> (i32, i32) {
    %c0_i32 = arith.constant 0 : i32
    %c0_i32_0 = arith.constant 0 : i32
    %c0_i32_1 = arith.constant 0 : i32
    return %c0_i32, %c0_i32_0 : i32, i32
  }
  func.func @transform_5(%arg0: i32) -> (i32, i32) {
    %c0_i32 = arith.constant 0 : i32
    %c0_i32_0 = arith.constant 0 : i32
    %c0_i32_1 = arith.constant 0 : i32
    return %c0_i32, %c0_i32_0 : i32, i32
  }
  func.func @transform_6(%arg0: i32) -> (i32, i32) {
    %c0_i32 = arith.constant 0 : i32
    %c0_i32_0 = arith.constant 0 : i32
    %c0_i32_1 = arith.constant 0 : i32
    return %c0_i32, %c0_i32_0 : i32, i32
  }
  func.func @transform_7(%arg0: i32) -> (i32, i32, i32) {
    %c0_i32 = arith.constant 0 : i32
    %c0_i32_0 = arith.constant 0 : i32
    %c0_i32_1 = arith.constant 0 : i32
    %c0_i32_2 = arith.constant 0 : i32
    return %c0_i32, %c0_i32_0, %c0_i32_1 : i32, i32, i32
  }
}

</mosaic_0001>

<llo_original>
// kernel: upconv_forward.1
$region0: #{upconv_forward.1}
  #allocation0 [shape = 'u32[]', space=smem, size = 0x4, offset = 0x4, fixed_abs, tag = 'smem constant byte address 0x4 - core index']
  #allocation1 [shape = 'u32[144,128]{1,0:T(1,128)}', space=vmem, size = 0x12000, scoped, tag = 'internal scratch']
  %s0 = inlined_call_operand.vmem [shape: f32[2,4,64], index: 0, kind: input, shape index: {}]
  %s1 = inlined_call_operand.vmem [shape: f32[2,4,324], index: 1, kind: input, shape index: {}]
  %s2 = inlined_call_operand.vmem [shape: f32[64,324], index: 2, kind: input, shape index: {}]
  %s3 = inlined_call_operand.vmem [shape: f32[4,72], index: 3, kind: input, shape index: {}]
  %s4 = inlined_call_operand.vmem [shape: f32[4,1], index: 4, kind: input, shape index: {}]
  %s5 = inlined_call_operand.vmem [shape: f32[8,36], index: 5, kind: input, shape index: {}]
  %s6 = inlined_call_operand.vmem [shape: f32[8,1], index: 6, kind: input, shape index: {}]
  %s7 = inlined_call_operand.vmem [shape: f32[2,8,324], index: 7, kind: output, shape index: {}]
  %s8 = sld [smem:[#allocation0]]
  $region38: #{upconv_forward.1} parent=0
    _
  %s10 = ssub.s32 1, %s8
  %s11 = scalar_select 0, %s10, %s8
  // Predicated region
  $region2: #{upconv_forward.1} parent=0 // pred_check
    _
  $region3: #{upconv_forward.1} parent=0 // pred_check_branch
    %13 = sbr.rel (0) target = $region5
  $region4: #{upconv_forward.1} parent=0 // pred_region
    _
  $region5: #{upconv_forward.1} parent=0 // pred_fallthru
    _
  // Predicated region
  $region6: #{upconv_forward.1} parent=0 // pred_check
    _
  $region7: #{upconv_forward.1} parent=0 // pred_check_branch
    %15 = sbr.rel (0) target = $region9
  $region8: #{upconv_forward.1} parent=0 // pred_region
    _
  $region9: #{upconv_forward.1} parent=0 // pred_fallthru
    _
  // Predicated region
  $region10: #{upconv_forward.1} parent=0 // pred_check
    _
  $region11: #{upconv_forward.1} parent=0 // pred_check_branch
    %17 = sbr.rel (0) target = $region13
  $region12: #{upconv_forward.1} parent=0 // pred_region
    _
  $region13: #{upconv_forward.1} parent=0 // pred_fallthru
    _
  // Predicated region
  $region14: #{upconv_forward.1} parent=0 // pred_check
    _
  $region15: #{upconv_forward.1} parent=0 // pred_check_branch
    %19 = sbr.rel (0) target = $region17
  $region16: #{upconv_forward.1} parent=0 // pred_region
    _
  $region17: #{upconv_forward.1} parent=0 // pred_fallthru
    _
  // Predicated region
  $region18: #{upconv_forward.1} parent=0 // pred_check
    _
  $region19: #{upconv_forward.1} parent=0 // pred_check_branch
    %21 = sbr.rel (0) target = $region21
  $region20: #{upconv_forward.1} parent=0 // pred_region
    _
  $region21: #{upconv_forward.1} parent=0 // pred_fallthru
    _
  // Predicated region
  $region22: #{upconv_forward.1} parent=0 // pred_check
    _
  $region23: #{upconv_forward.1} parent=0 // pred_check_branch
    %23 = sbr.rel (0) target = $region25
  $region24: #{upconv_forward.1} parent=0 // pred_region
    _
  $region25: #{upconv_forward.1} parent=0 // pred_fallthru
    _
  // Predicated region
  $region26: #{upconv_forward.1} parent=0 // pred_check
    _
  $region27: #{upconv_forward.1} parent=0 // pred_check_branch
    %25 = sbr.rel (0) target = $region29
  $region28: #{upconv_forward.1} parent=0 // pred_region
    _
  $region29: #{upconv_forward.1} parent=0 // pred_fallthru
    _
  %v26 = vld [vmem:[%s2] sm:$0xff]
  %v27 = vld [vmem:[%s2 + $0x8] sm:$0xff]
  %v28 = vld [vmem:[%s2 + $0x10] sm:$0xff]
  %v29 = vld [vmem:[%s2 + $0x18] sm:$0xff]
  %v30 = vld [vmem:[%s2 + $0x20] sm:$0xff]
  %v31 = vld [vmem:[%s2 + $0x28] sm:$0xff]
  %v32 = vld [vmem:[%s2 + $0x30] sm:$0xff]
  %v33 = vld [vmem:[%s2 + $0x38] sm:$0xff]
  %v34 = vld [vmem:[%s2 + $0x40] sm:$0xff]
  %v35 = vld [vmem:[%s2 + $0x48] sm:$0xff]
  %v36 = vld [vmem:[%s2 + $0x50] sm:$0xff]
  %v37 = vld [vmem:[%s2 + $0x58] sm:$0xff]
  %v38 = vld [vmem:[%s2 + $0x60] sm:$0xff]
  %v39 = vld [vmem:[%s2 + $0x68] sm:$0xff]
  %v40 = vld [vmem:[%s2 + $0x70] sm:$0xff]
  %v41 = vld [vmem:[%s2 + $0x78] sm:$0xff]
  %v42 = vld [vmem:[%s2 + $0x80] sm:$0xff]
  %v43 = vld [vmem:[%s2 + $0x88] sm:$0xff]
  %v44 = vld [vmem:[%s2 + $0x90] sm:$0xff]
  %v45 = vld [vmem:[%s2 + $0x98] sm:$0xff]
  %v46 = vld [vmem:[%s2 + $0xa0] sm:$0xff]
  %v47 = vld [vmem:[%s2 + $0xa8] sm:$0xff]
  %v48 = vld [vmem:[%s2 + $0xb0] sm:$0xff]
  %v49 = vld [vmem:[%s2 + $0xb8] sm:$0xff]
  %v50 = vld [vmem:[%s3] sm:$0xf]
  %v51 = vld [vmem:[%s5] sm:$0xff]
  %v52 = vld [vmem:[%s4] sm:$0xf]
  %v53 = vld [vmem:[%s6] sm:$0xff]
  %v54 = vld [vmem:[%s0] sm:$0xf]
  %v55 = vld [vmem:[%s1] sm:$0xff]
  %v56 = vld [vmem:[%s1 + $0x8] sm:$0xf]
  %vm57 = vcmask 523264
  %v59 = vsel %vm57, %v54, 0
  %61 = vmatprep.subr.mxu0 %v27
  %62 = vmatpush1.msra.mxu0 %v26
  %63 = vmatprep.subr.mxu0 %v30
  %64 = vmatpush1.msra.mxu0 %v29
  %65 = vmatprep.subr.mxu0 %v33
  %66 = vmatpush1.msra.mxu0 %v32
  %67 = vmatprep.subr.mxu0 %v36
  %68 = vmatpush1.msra.mxu0 %v35
  %69 = vmatprep.subr.mxu0 %v39
  %70 = vmatpush1.msra.mxu0 %v38
  %71 = vmatprep.subr.mxu0 %v42
  %72 = vmatpush1.msra.mxu0 %v41
  %73 = vmatprep.subr.mxu0 %v45
  %74 = vmatpush1.msra.mxu0 %v44
  %75 = vmatprep.subr.mxu0 %v48
  %76 = vmatpush1.msra.mxu0 %v47
  %77 = vmatprep.subr.mxu0 0.0
  %78 = vmatpush1.msra.mxu0 0.0
  %79 = vmatprep.subr.mxu0 0.0
  %80 = vmatpush1.msra.mxu0 0.0
  %81 = vmatprep.subr.mxu0 0.0
  %82 = vmatpush1.msra.mxu0 0.0
  %83 = vmatprep.subr.mxu0 0.0
  %84 = vmatpush1.msra.mxu0 0.0
  %85 = vmatprep.subr.mxu0 0.0
  %86 = vmatpush1.msra.mxu0 0.0
  %87 = vmatprep.subr.mxu0 0.0
  %88 = vmatpush1.msra.mxu0 0.0
  %89 = vmatprep.subr.mxu0 0.0
  %90 = vmatpush1.msra.mxu0 0.0
  %91 = vmatprep.subr.mxu0 0.0
  %92 = vmatpush1.msra.mxu0 0.0
  %93 = vmatprep.subr.mxu0 0.0
  %94 = vmatpush1.msra.mxu0 0.0
  %95 = vmatprep.subr.mxu0 0.0
  %96 = vmatpush1.msra.mxu0 0.0
  %97 = vmatprep.subr.mxu0 0.0
  %98 = vmatpush1.msra.mxu0 0.0
  %99 = vmatprep.subr.mxu0 0.0
  %100 = vmatpush1.msra.mxu0 0.0
  %101 = vmatprep.subr.mxu0 0.0
  %102 = vmatpush1.msra.mxu0 0.0
  %103 = vmatprep.subr.mxu0 0.0
  %104 = vmatpush1.msra.mxu0 0.0
  %105 = vmatprep.subr.mxu0 0.0
  %106 = vmatpush1.msra.mxu0 0.0
  %107 = vmatprep.subr.mxu0 0.0
  %108 = vmatpush1.msra.mxu0 0.0
  %109 = vmatprep.subr.mxu0 0.0
  %110 = vmatpush1.msra.mxu0 0.0
  %111 = vmatprep.subr.mxu0 0.0
  %112 = vmatpush1.msra.mxu0 0.0
  %113 = vmatprep.subr.mxu0 0.0
  %114 = vmatpush1.msra.mxu0 0.0
  %115 = vmatprep.subr.mxu0 0.0
  %116 = vmatpush1.msra.mxu0 0.0
  %117 = vmatprep.subr.mxu0 0.0
  %118 = vmatpush1.msra.mxu0 0.0
  %119 = vmatprep.subr.mxu0 0.0
  %120 = vmatpush1.msra.mxu0 0.0
  %121 = vmatprep.subr.mxu0 0.0
  %122 = vmatpush1.msra.mxu0 0.0
  %123 = vmatprep.subr.mxu0 0.0
  %124 = vmatpush1.msra.mxu0 0.0
  %125 = vmatprep.mubr.f32.mxu0 0.0
  %126 = vmatmul.mubr.f32.gmra.mrb[0].mxu0 %v59
  %v127 = vpop.f32.mrb[0].mxu0
  %v128 = vadd.f32 0.0, %v127
  %v129 = vpop.f32.mrb[0].mxu0
  %v130 = vadd.f32 0.0, %v129
  %131 = vdwg.mxu0
  %132 = vmatprep.subr.mxu0 0.0
  %133 = vmatpush1.msra.mxu0 %v28
  %134 = vmatprep.subr.mxu0 0.0
  %135 = vmatpush1.msra.mxu0 %v31
  %136 = vmatprep.subr.mxu0 0.0
  %137 = vmatpush1.msra.mxu0 %v34
  %138 = vmatprep.subr.mxu0 0.0
  %139 = vmatpush1.msra.mxu0 %v37
  %140 = vmatprep.subr.mxu0 0.0
  %141 = vmatpush1.msra.mxu0 %v40
  %142 = vmatprep.subr.mxu0 0.0
  %143 = vmatpush1.msra.mxu0 %v43
  %144 = vmatprep.subr.mxu0 0.0
  %145 = vmatpush1.msra.mxu0 %v46
  %146 = vmatprep.subr.mxu0 0.0
  %147 = vmatpush1.msra.mxu0 %v49
  %148 = vmatprep.subr.mxu0 0.0
  %149 = vmatpush1.msra.mxu0 0.0
  %150 = vmatprep.subr.mxu0 0.0
  %151 = vmatpush1.msra.mxu0 0.0
  %152 = vmatprep.subr.mxu0 0.0
  %153 = vmatpush1.msra.mxu0 0.0
  %154 = vmatprep.subr.mxu0 0.0
  %155 = vmatpush1.msra.mxu0 0.0
  %156 = vmatprep.subr.mxu0 0.0
  %157 = vmatpush1.msra.mxu0 0.0
  %158 = vmatprep.subr.mxu0 0.0
  %159 = vmatpush1.msra.mxu0 0.0
  %160 = vmatprep.subr.mxu0 0.0
  %161 = vmatpush1.msra.mxu0 0.0
  %162 = vmatprep.subr.mxu0 0.0
  %163 = vmatpush1.msra.mxu0 0.0
  %164 = vmatprep.subr.mxu0 0.0
  %165 = vmatpush1.msra.mxu0 0.0
  %166 = vmatprep.subr.mxu0 0.0
  %167 = vmatpush1.msra.mxu0 0.0
  %168 = vmatprep.subr.mxu0 0.0
  %169 = vmatpush1.msra.mxu0 0.0
  %170 = vmatprep.subr.mxu0 0.0
  %171 = vmatpush1.msra.mxu0 0.0
  %172 = vmatprep.subr.mxu0 0.0
  %173 = vmatpush1.msra.mxu0 0.0
  %174 = vmatprep.subr.mxu0 0.0
  %175 = vmatpush1.msra.mxu0 0.0
  %176 = vmatprep.subr.mxu0 0.0
  %177 = vmatpush1.msra.mxu0 0.0
  %178 = vmatprep.subr.mxu0 0.0
  %179 = vmatpush1.msra.mxu0 0.0
  %180 = vmatprep.subr.mxu0 0.0
  %181 = vmatpush1.msra.mxu0 0.0
  %182 = vmatprep.subr.mxu0 0.0
  %183 = vmatpush1.msra.mxu0 0.0
  %184 = vmatprep.subr.mxu0 0.0
  %185 = vmatpush1.msra.mxu0 0.0
  %186 = vmatprep.subr.mxu0 0.0
  %187 = vmatpush1.msra.mxu0 0.0
  %188 = vmatprep.subr.mxu0 0.0
  %189 = vmatpush1.msra.mxu0 0.0
  %190 = vmatprep.subr.mxu0 0.0
  %191 = vmatpush1.msra.mxu0 0.0
  %192 = vmatprep.subr.mxu0 0.0
  %193 = vmatpush1.msra.mxu0 0.0
  %194 = vmatprep.subr.mxu0 0.0
  %195 = vmatpush1.msra.mxu0 0.0
  %196 = vmatprep.mubr.f32.mxu0 0.0
  %197 = vmatmul.mubr.f32.gmra.mrb[0].mxu0 %v59
  %v198 = vpop.f32.mrb[0].mxu0
  %v199 = vadd.f32 0.0, %v198
  %v200 = vpop.f32.mrb[0].mxu0
  %201 = vdwg.mxu0
  %v203 = vcombine.high %v55, %v55
  %v208 = vrot.slane %v128, 4
  %v209 = vrot.slane %v130, 4
  %v210 = vrot.slane %v199, 4
  %vm214 = vcmask 1043456
  %v215 = vsel %vm214, %v55, %v208
  %v216 = vsel %vm214, %v203, %v209
  %v217 = vsel %vm214, %v56, %v210
  %vm218 = vcmask 556032
  %v219 = vsel %vm218, %v217, 0.0
  %223 = vrot.lane.b32.xlu0 %v215, 127
  %v224 = vpop.permute.xlu0 %223
  %225 = vrot.lane.b32.xlu0 %v216, 127
  %v226 = vpop.permute.xlu0 %225
  %227 = vrot.lane.b32.xlu0 %v219, 127
  %v228 = vpop.permute.xlu0 %227
  %vm229 = vcmask 1039360
  %v230 = vsel %vm229, %v224, %v226
  %v231 = vsel %vm229, %v226, %v228
  %235 = vrot.lane.b32.xlu0 %v215, 126
  %v236 = vpop.permute.xlu0 %235
  %237 = vrot.lane.b32.xlu0 %v216, 126
  %v238 = vpop.permute.xlu0 %237
  %239 = vrot.lane.b32.xlu0 %v219, 126
  %v240 = vpop.permute.xlu0 %239
  %vm241 = vcmask 1031168
  %v242 = vsel %vm241, %v236, %v238
  %v243 = vsel %vm241, %v238, %v240
  %247 = vrot.lane.b32.xlu0 %v215, 110
  %v248 = vpop.permute.xlu0 %247
  %249 = vrot.lane.b32.xlu0 %v216, 110
  %v250 = vpop.permute.xlu0 %249
  %251 = vrot.lane.b32.xlu0 %v219, 110
  %v252 = vpop.permute.xlu0 %251
  %vm253 = vcmask 900096
  %v254 = vsel %vm253, %v248, %v250
  %v255 = vsel %vm253, %v250, %v252
  %259 = vrot.lane.b32.xlu0 %v215, 109
  %v260 = vpop.permute.xlu0 %259
  %261 = vrot.lane.b32.xlu0 %v216, 109
  %v262 = vpop.permute.xlu0 %261
  %263 = vrot.lane.b32.xlu0 %v219, 109
  %v264 = vpop.permute.xlu0 %263
  %vm265 = vcmask 891904
  %v266 = vsel %vm265, %v260, %v262
  %v267 = vsel %vm265, %v262, %v264
  %271 = vrot.lane.b32.xlu0 %v215, 108
  %v272 = vpop.permute.xlu0 %271
  %273 = vrot.lane.b32.xlu0 %v216, 108
  %v274 = vpop.permute.xlu0 %273
  %275 = vrot.lane.b32.xlu0 %v219, 108
  %v276 = vpop.permute.xlu0 %275
  %vm277 = vcmask 883712
  %v278 = vsel %vm277, %v272, %v274
  %v279 = vsel %vm277, %v274, %v276
  %283 = vrot.lane.b32.xlu0 %v215, 92
  %v284 = vpop.permute.xlu0 %283
  %285 = vrot.lane.b32.xlu0 %v216, 92
  %v286 = vpop.permute.xlu0 %285
  %287 = vrot.lane.b32.xlu0 %v219, 92
  %v288 = vpop.permute.xlu0 %287
  %vm289 = vcmask 752640
  %v290 = vsel %vm289, %v284, %v286
  %v291 = vsel %vm289, %v286, %v288
  %295 = vrot.lane.b32.xlu0 %v215, 91
  %v296 = vpop.permute.xlu0 %295
  %297 = vrot.lane.b32.xlu0 %v216, 91
  %v298 = vpop.permute.xlu0 %297
  %299 = vrot.lane.b32.xlu0 %v219, 91
  %v300 = vpop.permute.xlu0 %299
  %vm301 = vcmask 744448
  %v302 = vsel %vm301, %v296, %v298
  %v303 = vsel %vm301, %v298, %v300
  %307 = vrot.lane.b32.xlu0 %v215, 90
  %v308 = vpop.permute.xlu0 %307
  %309 = vrot.lane.b32.xlu0 %v216, 90
  %v310 = vpop.permute.xlu0 %309
  %311 = vrot.lane.b32.xlu0 %v219, 90
  %v312 = vpop.permute.xlu0 %311
  %vm313 = vcmask 736256
  %v314 = vsel %vm313, %v308, %v310
  %v315 = vsel %vm313, %v310, %v312
  %320 = vset.pattern.permute.xlu0 0
  %321 = vperm.xlu0 %320, %v52
  %v322 = vpop.permute.xlu0 %321
  %vm324 = vcmask 588800
  %v326 = vsel %vm324, %v50, 0
  %328 = vmatprep.subr.mxu0 %v216
  %329 = vmatpush1.msra.mxu0 %v215
  %330 = vmatprep.subr.mxu0 %v231
  %331 = vmatpush1.msra.mxu0 %v230
  %332 = vmatprep.subr.mxu0 %v243
  %333 = vmatpush1.msra.mxu0 %v242
  %334 = vmatprep.subr.mxu0 %v255
  %335 = vmatpush1.msra.mxu0 %v254
  %336 = vmatprep.subr.mxu0 %v267
  %337 = vmatpush1.msra.mxu0 %v266
  %338 = vmatprep.subr.mxu0 %v279
  %339 = vmatpush1.msra.mxu0 %v278
  %340 = vmatprep.subr.mxu0 %v291
  %341 = vmatpush1.msra.mxu0 %v290
  %342 = vmatprep.subr.mxu0 %v303
  %343 = vmatpush1.msra.mxu0 %v302
  %344 = vmatprep.subr.mxu0 %v315
  %345 = vmatpush1.msra.mxu0 %v314
  %346 = vmatprep.subr.mxu0 0.0
  %347 = vmatpush1.msra.mxu0 0.0
  %348 = vmatprep.subr.mxu0 0.0
  %349 = vmatpush1.msra.mxu0 0.0
  %350 = vmatprep.subr.mxu0 0.0
  %351 = vmatpush1.msra.mxu0 0.0
  %352 = vmatprep.subr.mxu0 0.0
  %353 = vmatpush1.msra.mxu0 0.0
  %354 = vmatprep.subr.mxu0 0.0
  %355 = vmatpush1.msra.mxu0 0.0
  %356 = vmatprep.subr.mxu0 0.0
  %357 = vmatpush1.msra.mxu0 0.0
  %358 = vmatprep.subr.mxu0 0.0
  %359 = vmatpush1.msra.mxu0 0.0
  %360 = vmatprep.subr.mxu0 0.0
  %361 = vmatpush1.msra.mxu0 0.0
  %362 = vmatprep.subr.mxu0 0.0
  %363 = vmatpush1.msra.mxu0 0.0
  %364 = vmatprep.subr.mxu0 0.0
  %365 = vmatpush1.msra.mxu0 0.0
  %366 = vmatprep.subr.mxu0 0.0
  %367 = vmatpush1.msra.mxu0 0.0
  %368 = vmatprep.subr.mxu0 0.0
  %369 = vmatpush1.msra.mxu0 0.0
  %370 = vmatprep.subr.mxu0 0.0
  %371 = vmatpush1.msra.mxu0 0.0
  %372 = vmatprep.subr.mxu0 0.0
  %373 = vmatpush1.msra.mxu0 0.0
  %374 = vmatprep.subr.mxu0 0.0
  %375 = vmatpush1.msra.mxu0 0.0
  %376 = vmatprep.subr.mxu0 0.0
  %377 = vmatpush1.msra.mxu0 0.0
  %378 = vmatprep.subr.mxu0 0.0
  %379 = vmatpush1.msra.mxu0 0.0
  %380 = vmatprep.subr.mxu0 0.0
  %381 = vmatpush1.msra.mxu0 0.0
  %382 = vmatprep.subr.mxu0 0.0
  %383 = vmatpush1.msra.mxu0 0.0
  %384 = vmatprep.subr.mxu0 0.0
  %385 = vmatpush1.msra.mxu0 0.0
  %386 = vmatprep.subr.mxu0 0.0
  %387 = vmatpush1.msra.mxu0 0.0
  %388 = vmatprep.subr.mxu0 0.0
  %389 = vmatpush1.msra.mxu0 0.0
  %390 = vmatprep.subr.mxu0 0.0
  %391 = vmatpush1.msra.mxu0 0.0
  %392 = vmatprep.mubr.f32.mxu0 0.0
  %393 = vmatmul.mubr.f32.gmra.mrb[0].mxu0 %v326
  %v394 = vpop.f32.mrb[0].mxu0
  %v395 = vadd.f32 %v322, %v394
  %v396 = vpop.f32.mrb[0].mxu0
  %v397 = vadd.f32 %v322, %v396
  %398 = vdwg.mxu0
  %399 = vmatprep.subr.mxu0 0.0
  %400 = vmatpush1.msra.mxu0 %v219
  %401 = vmatprep.subr.mxu0 0.0
  %402 = vmatpush1.msra.mxu0 %v228
  %403 = vmatprep.subr.mxu0 0.0
  %404 = vmatpush1.msra.mxu0 %v240
  %405 = vmatprep.subr.mxu0 0.0
  %406 = vmatpush1.msra.mxu0 %v252
  %407 = vmatprep.subr.mxu0 0.0
  %408 = vmatpush1.msra.mxu0 %v264
  %409 = vmatprep.subr.mxu0 0.0
  %410 = vmatpush1.msra.mxu0 %v276
  %411 = vmatprep.subr.mxu0 0.0
  %412 = vmatpush1.msra.mxu0 %v288
  %413 = vmatprep.subr.mxu0 0.0
  %414 = vmatpush1.msra.mxu0 %v300
  %415 = vmatprep.subr.mxu0 0.0
  %416 = vmatpush1.msra.mxu0 %v312
  %417 = vmatprep.subr.mxu0 0.0
  %418 = vmatpush1.msra.mxu0 0.0
  %419 = vmatprep.subr.mxu0 0.0
  %420 = vmatpush1.msra.mxu0 0.0
  %421 = vmatprep.subr.mxu0 0.0
  %422 = vmatpush1.msra.mxu0 0.0
  %423 = vmatprep.subr.mxu0 0.0
  %424 = vmatpush1.msra.mxu0 0.0
  %425 = vmatprep.subr.mxu0 0.0
  %426 = vmatpush1.msra.mxu0 0.0
  %427 = vmatprep.subr.mxu0 0.0
  %428 = vmatpush1.msra.mxu0 0.0
  %429 = vmatprep.subr.mxu0 0.0
  %430 = vmatpush1.msra.mxu0 0.0
  %431 = vmatprep.subr.mxu0 0.0
  %432 = vmatpush1.msra.mxu0 0.0
  %433 = vmatprep.subr.mxu0 0.0
  %434 = vmatpush1.msra.mxu0 0.0
  %435 = vmatprep.subr.mxu0 0.0
  %436 = vmatpush1.msra.mxu0 0.0
  %437 = vmatprep.subr.mxu0 0.0
  %438 = vmatpush1.msra.mxu0 0.0
  %439 = vmatprep.subr.mxu0 0.0
  %440 = vmatpush1.msra.mxu0 0.0
  %441 = vmatprep.subr.mxu0 0.0
  %442 = vmatpush1.msra.mxu0 0.0
  %443 = vmatprep.subr.mxu0 0.0
  %444 = vmatpush1.msra.mxu0 0.0
  %445 = vmatprep.subr.mxu0 0.0
  %446 = vmatpush1.msra.mxu0 0.0
  %447 = vmatprep.subr.mxu0 0.0
  %448 = vmatpush1.msra.mxu0 0.0
  %449 = vmatprep.subr.mxu0 0.0
  %450 = vmatpush1.msra.mxu0 0.0
  %451 = vmatprep.subr.mxu0 0.0
  %452 = vmatpush1.msra.mxu0 0.0
  %453 = vmatprep.subr.mxu0 0.0
  %454 = vmatpush1.msra.mxu0 0.0
  %455 = vmatprep.subr.mxu0 0.0
  %456 = vmatpush1.msra.mxu0 0.0
  %457 = vmatprep.subr.mxu0 0.0
  %458 = vmatpush1.msra.mxu0 0.0
  %459 = vmatprep.subr.mxu0 0.0
  %460 = vmatpush1.msra.mxu0 0.0
  %461 = vmatprep.subr.mxu0 0.0
  %462 = vmatpush1.msra.mxu0 0.0
  %463 = vmatprep.mubr.f32.mxu0 0.0
  %464 = vmatmul.mubr.f32.gmra.mrb[0].mxu0 %v326
  %v465 = vpop.f32.mrb[0].mxu0
  %v466 = vadd.f32 %v322, %v465
  %v467 = vpop.f32.mrb[0].mxu0
  %468 = vdwg.mxu0
  %v469 = vmax.f32 %v395, 0.0
  %v470 = vmax.f32 %v397, 0.0
  %v471 = vmax.f32 %v466, 0.0
  %v472 = vsel %vm218, %v471, 0.0
  %v476 = vrot.slane %v469, 4
  %v477 = vrot.slane %v470, 4
  %v478 = vrot.slane %v472, 4
  %479 = vrot.lane.b32.xlu0 %v476, 127
  %v480 = vpop.permute.xlu0 %479
  %481 = vrot.lane.b32.xlu0 %v477, 127
  %v482 = vpop.permute.xlu0 %481
  %483 = vrot.lane.b32.xlu0 %v478, 127
  %v484 = vpop.permute.xlu0 %483
  %v485 = vsel %vm229, %v480, %v482
  %v486 = vsel %vm229, %v482, %v484
  %490 = vrot.lane.b32.xlu0 %v469, 126
  %v491 = vpop.permute.xlu0 %490
  %492 = vrot.lane.b32.xlu0 %v470, 126
  %v493 = vpop.permute.xlu0 %492
  %494 = vrot.lane.b32.xlu0 %v472, 126
  %v495 = vpop.permute.xlu0 %494
  %v496 = vsel %vm241, %v491, %v493
  %v497 = vsel %vm241, %v493, %v495
  %501 = vrot.lane.b32.xlu0 %v476, 110
  %v502 = vpop.permute.xlu0 %501
  %503 = vrot.lane.b32.xlu0 %v477, 110
  %v504 = vpop.permute.xlu0 %503
  %505 = vrot.lane.b32.xlu0 %v478, 110
  %v506 = vpop.permute.xlu0 %505
  %v507 = vsel %vm253, %v502, %v504
  %v508 = vsel %vm253, %v504, %v506
  %512 = vrot.lane.b32.xlu0 %v469, 109
  %v513 = vpop.permute.xlu0 %512
  %514 = vrot.lane.b32.xlu0 %v470, 109
  %v515 = vpop.permute.xlu0 %514
  %516 = vrot.lane.b32.xlu0 %v472, 109
  %v517 = vpop.permute.xlu0 %516
  %v518 = vsel %vm265, %v513, %v515
  %v519 = vsel %vm265, %v515, %v517
  %523 = vrot.lane.b32.xlu0 %v476, 108
  %v524 = vpop.permute.xlu0 %523
  %525 = vrot.lane.b32.xlu0 %v477, 108
  %v526 = vpop.permute.xlu0 %525
  %527 = vrot.lane.b32.xlu0 %v478, 108
  %v528 = vpop.permute.xlu0 %527
  %v529 = vsel %vm277, %v524, %v526
  %v530 = vsel %vm277, %v526, %v528
  %534 = vrot.lane.b32.xlu0 %v469, 92
  %v535 = vpop.permute.xlu0 %534
  %536 = vrot.lane.b32.xlu0 %v470, 92
  %v537 = vpop.permute.xlu0 %536
  %538 = vrot.lane.b32.xlu0 %v472, 92
  %v539 = vpop.permute.xlu0 %538
  %v540 = vsel %vm289, %v535, %v537
  %v541 = vsel %vm289, %v537, %v539
  %545 = vrot.lane.b32.xlu0 %v476, 91
  %v546 = vpop.permute.xlu0 %545
  %547 = vrot.lane.b32.xlu0 %v477, 91
  %v548 = vpop.permute.xlu0 %547
  %549 = vrot.lane.b32.xlu0 %v478, 91
  %v550 = vpop.permute.xlu0 %549
  %v551 = vsel %vm301, %v546, %v548
  %v552 = vsel %vm301, %v548, %v550
  %556 = vrot.lane.b32.xlu0 %v469, 90
  %v557 = vpop.permute.xlu0 %556
  %558 = vrot.lane.b32.xlu0 %v470, 90
  %v559 = vpop.permute.xlu0 %558
  %560 = vrot.lane.b32.xlu0 %v472, 90
  %v561 = vpop.permute.xlu0 %560
  %v562 = vsel %vm313, %v557, %v559
  %v563 = vsel %vm313, %v559, %v561
  %v564 = vsel %vm214, %v469, %v485
  %v565 = vsel %vm214, %v470, %v486
  %v566 = vsel %vm214, %v472, %v484
  %v567 = vsel %vm214, %v496, %v507
  %v568 = vsel %vm214, %v497, %v508
  %v569 = vsel %vm214, %v495, %v506
  %v570 = vsel %vm214, %v518, %v529
  %v571 = vsel %vm214, %v519, %v530
  %v572 = vsel %vm214, %v517, %v528
  %v573 = vsel %vm214, %v540, %v551
  %v574 = vsel %vm214, %v541, %v552
  %v575 = vsel %vm214, %v539, %v550
  %577 = vset.pattern.permute.xlu0 0
  %578 = vperm.xlu0 %577, %v53
  %v579 = vpop.permute.xlu0 %578
  %vm581 = vcmask 293888
  %v583 = vsel %vm581, %v51, 0
  %v585 = vsel %vm214, %v562, 0
  %v587 = vsel %vm214, %v563, 0
  %v589 = vsel %vm214, %v561, 0
  %591 = vmatprep.subr.mxu0 %v565
  %592 = vmatpush1.msra.mxu0 %v564
  %593 = vmatprep.subr.mxu0 %v568
  %594 = vmatpush1.msra.mxu0 %v567
  %595 = vmatprep.subr.mxu0 %v571
  %596 = vmatpush1.msra.mxu0 %v570
  %597 = vmatprep.subr.mxu0 %v574
  %598 = vmatpush1.msra.mxu0 %v573
  %599 = vmatprep.subr.mxu0 %v587
  %600 = vmatpush1.msra.mxu0 %v585
  %601 = vmatprep.subr.mxu0 0.0
  %602 = vmatpush1.msra.mxu0 0.0
  %603 = vmatprep.subr.mxu0 0.0
  %604 = vmatpush1.msra.mxu0 0.0
  %605 = vmatprep.subr.mxu0 0.0
  %606 = vmatpush1.msra.mxu0 0.0
  %607 = vmatprep.subr.mxu0 0.0
  %608 = vmatpush1.msra.mxu0 0.0
  %609 = vmatprep.subr.mxu0 0.0
  %610 = vmatpush1.msra.mxu0 0.0
  %611 = vmatprep.subr.mxu0 0.0
  %612 = vmatpush1.msra.mxu0 0.0
  %613 = vmatprep.subr.mxu0 0.0
  %614 = vmatpush1.msra.mxu0 0.0
  %615 = vmatprep.subr.mxu0 0.0
  %616 = vmatpush1.msra.mxu0 0.0
  %617 = vmatprep.subr.mxu0 0.0
  %618 = vmatpush1.msra.mxu0 0.0
  %619 = vmatprep.subr.mxu0 0.0
  %620 = vmatpush1.msra.mxu0 0.0
  %621 = vmatprep.subr.mxu0 0.0
  %622 = vmatpush1.msra.mxu0 0.0
  %623 = vmatprep.subr.mxu0 0.0
  %624 = vmatpush1.msra.mxu0 0.0
  %625 = vmatprep.subr.mxu0 0.0
  %626 = vmatpush1.msra.mxu0 0.0
  %627 = vmatprep.subr.mxu0 0.0
  %628 = vmatpush1.msra.mxu0 0.0
  %629 = vmatprep.subr.mxu0 0.0
  %630 = vmatpush1.msra.mxu0 0.0
  %631 = vmatprep.subr.mxu0 0.0
  %632 = vmatpush1.msra.mxu0 0.0
  %633 = vmatprep.subr.mxu0 0.0
  %634 = vmatpush1.msra.mxu0 0.0
  %635 = vmatprep.subr.mxu0 0.0
  %636 = vmatpush1.msra.mxu0 0.0
  %637 = vmatprep.subr.mxu0 0.0
  %638 = vmatpush1.msra.mxu0 0.0
  %639 = vmatprep.subr.mxu0 0.0
  %640 = vmatpush1.msra.mxu0 0.0
  %641 = vmatprep.subr.mxu0 0.0
  %642 = vmatpush1.msra.mxu0 0.0
  %643 = vmatprep.subr.mxu0 0.0
  %644 = vmatpush1.msra.mxu0 0.0
  %645 = vmatprep.subr.mxu0 0.0
  %646 = vmatpush1.msra.mxu0 0.0
  %647 = vmatprep.subr.mxu0 0.0
  %648 = vmatpush1.msra.mxu0 0.0
  %649 = vmatprep.subr.mxu0 0.0
  %650 = vmatpush1.msra.mxu0 0.0
  %651 = vmatprep.subr.mxu0 0.0
  %652 = vmatpush1.msra.mxu0 0.0
  %653 = vmatprep.subr.mxu0 0.0
  %654 = vmatpush1.msra.mxu0 0.0
  %655 = vmatprep.mubr.f32.mxu0 0.0
  %656 = vmatmul.mubr.f32.gmra.mrb[0].mxu0 %v583
  %v657 = vpop.f32.mrb[0].mxu0
  %v658 = vadd.f32 %v579, %v657
  %v659 = vpop.f32.mrb[0].mxu0
  %v660 = vadd.f32 %v579, %v659
  %661 = vdwg.mxu0
  %662 = vmatprep.subr.mxu0 0.0
  %663 = vmatpush1.msra.mxu0 %v566
  %664 = vmatprep.subr.mxu0 0.0
  %665 = vmatpush1.msra.mxu0 %v569
  %666 = vmatprep.subr.mxu0 0.0
  %667 = vmatpush1.msra.mxu0 %v572
  %668 = vmatprep.subr.mxu0 0.0
  %669 = vmatpush1.msra.mxu0 %v575
  %670 = vmatprep.subr.mxu0 0.0
  %671 = vmatpush1.msra.mxu0 %v589
  %672 = vmatprep.subr.mxu0 0.0
  %673 = vmatpush1.msra.mxu0 0.0
  %674 = vmatprep.subr.mxu0 0.0
  %675 = vmatpush1.msra.mxu0 0.0
  %676 = vmatprep.subr.mxu0 0.0
  %677 = vmatpush1.msra.mxu0 0.0
  %678 = vmatprep.subr.mxu0 0.0
  %679 = vmatpush1.msra.mxu0 0.0
  %680 = vmatprep.subr.mxu0 0.0
  %681 = vmatpush1.msra.mxu0 0.0
  %682 = vmatprep.subr.mxu0 0.0
  %683 = vmatpush1.msra.mxu0 0.0
  %684 = vmatprep.subr.mxu0 0.0
  %685 = vmatpush1.msra.mxu0 0.0
  %686 = vmatprep.subr.mxu0 0.0
  %687 = vmatpush1.msra.mxu0 0.0
  %688 = vmatprep.subr.mxu0 0.0
  %689 = vmatpush1.msra.mxu0 0.0
  %690 = vmatprep.subr.mxu0 0.0
  %691 = vmatpush1.msra.mxu0 0.0
  %692 = vmatprep.subr.mxu0 0.0
  %693 = vmatpush1.msra.mxu0 0.0
  %694 = vmatprep.subr.mxu0 0.0
  %695 = vmatpush1.msra.mxu0 0.0
  %696 = vmatprep.subr.mxu0 0.0
  %697 = vmatpush1.msra.mxu0 0.0
  %698 = vmatprep.subr.mxu0 0.0
  %699 = vmatpush1.msra.mxu0 0.0
  %700 = vmatprep.subr.mxu0 0.0
  %701 = vmatpush1.msra.mxu0 0.0
  %702 = vmatprep.subr.mxu0 0.0
  %703 = vmatpush1.msra.mxu0 0.0
  %704 = vmatprep.subr.mxu0 0.0
  %705 = vmatpush1.msra.mxu0 0.0
  %706 = vmatprep.subr.mxu0 0.0
  %707 = vmatpush1.msra.mxu0 0.0
  %708 = vmatprep.subr.mxu0 0.0
  %709 = vmatpush1.msra.mxu0 0.0
  %710 = vmatprep.subr.mxu0 0.0
  %711 = vmatpush1.msra.mxu0 0.0
  %712 = vmatprep.subr.mxu0 0.0
  %713 = vmatpush1.msra.mxu0 0.0
  %714 = vmatprep.subr.mxu0 0.0
  %715 = vmatpush1.msra.mxu0 0.0
  %716 = vmatprep.subr.mxu0 0.0
  %717 = vmatpush1.msra.mxu0 0.0
  %718 = vmatprep.subr.mxu0 0.0
  %719 = vmatpush1.msra.mxu0 0.0
  %720 = vmatprep.subr.mxu0 0.0
  %721 = vmatpush1.msra.mxu0 0.0
  %722 = vmatprep.subr.mxu0 0.0
  %723 = vmatpush1.msra.mxu0 0.0
  %724 = vmatprep.subr.mxu0 0.0
  %725 = vmatpush1.msra.mxu0 0.0
  %726 = vmatprep.mubr.f32.mxu0 0.0
  %727 = vmatmul.mubr.f32.gmra.mrb[0].mxu0 %v583
  %v728 = vpop.f32.mrb[0].mxu0
  %v729 = vadd.f32 %v579, %v728
  %v730 = vpop.f32.mrb[0].mxu0
  %731 = vdwg.mxu0
  %v732 = vmax.f32 %v658, 0.0
  %v733 = vmax.f32 %v660, 0.0
  %v734 = vmax.f32 %v729, 0.0
  %735 = vst [vmem:[%s7] sm:$0xff] %v732
  %736 = vst [vmem:[%s7 + $0x8] sm:$0xff] %v733
  %737 = vst.msk [vmem:[%s7 + $0x10] sm:$0xff] %vm218, %v734
  %s738 = scalar_lea.vmem %s0, 4
  %v739 = vld [vmem:[%s738] sm:$0xf]
  %s740 = scalar_lea.vmem %s1, 12
  %v741 = vld [vmem:[%s740] sm:$0xff]
  %v742 = vld [vmem:[%s740 + $0x8] sm:$0xf]
  %v744 = vsel %vm57, %v739, 0
  %746 = vmatprep.subr.mxu0 %v27
  %747 = vmatpush1.msra.mxu0 %v26
  %748 = vmatprep.subr.mxu0 %v30
  %749 = vmatpush1.msra.mxu0 %v29
  %750 = vmatprep.subr.mxu0 %v33
  %751 = vmatpush1.msra.mxu0 %v32
  %752 = vmatprep.subr.mxu0 %v36
  %753 = vmatpush1.msra.mxu0 %v35
  %754 = vmatprep.subr.mxu0 %v39
  %755 = vmatpush1.msra.mxu0 %v38
  %756 = vmatprep.subr.mxu0 %v42
  %757 = vmatpush1.msra.mxu0 %v41
  %758 = vmatprep.subr.mxu0 %v45
  %759 = vmatpush1.msra.mxu0 %v44
  %760 = vmatprep.subr.mxu0 %v48
  %761 = vmatpush1.msra.mxu0 %v47
  %762 = vmatprep.subr.mxu0 0.0
  %763 = vmatpush1.msra.mxu0 0.0
  %764 = vmatprep.subr.mxu0 0.0
  %765 = vmatpush1.msra.mxu0 0.0
  %766 = vmatprep.subr.mxu0 0.0
  %767 = vmatpush1.msra.mxu0 0.0
  %768 = vmatprep.subr.mxu0 0.0
  %769 = vmatpush1.msra.mxu0 0.0
  %770 = vmatprep.subr.mxu0 0.0
  %771 = vmatpush1.msra.mxu0 0.0
  %772 = vmatprep.subr.mxu0 0.0
  %773 = vmatpush1.msra.mxu0 0.0
  %774 = vmatprep.subr.mxu0 0.0
  %775 = vmatpush1.msra.mxu0 0.0
  %776 = vmatprep.subr.mxu0 0.0
  %777 = vmatpush1.msra.mxu0 0.0
  %778 = vmatprep.subr.mxu0 0.0
  %779 = vmatpush1.msra.mxu0 0.0
  %780 = vmatprep.subr.mxu0 0.0
  %781 = vmatpush1.msra.mxu0 0.0
  %782 = vmatprep.subr.mxu0 0.0
  %783 = vmatpush1.msra.mxu0 0.0
  %784 = vmatprep.subr.mxu0 0.0
  %785 = vmatpush1.msra.mxu0 0.0
  %786 = vmatprep.subr.mxu0 0.0
  %787 = vmatpush1.msra.mxu0 0.0
  %788 = vmatprep.subr.mxu0 0.0
  %789 = vmatpush1.msra.mxu0 0.0
  %790 = vmatprep.subr.mxu0 0.0
  %791 = vmatpush1.msra.mxu0 0.0
  %792 = vmatprep.subr.mxu0 0.0
  %793 = vmatpush1.msra.mxu0 0.0
  %794 = vmatprep.subr.mxu0 0.0
  %795 = vmatpush1.msra.mxu0 0.0
  %796 = vmatprep.subr.mxu0 0.0
  %797 = vmatpush1.msra.mxu0 0.0
  %798 = vmatprep.subr.mxu0 0.0
  %799 = vmatpush1.msra.mxu0 0.0
  %800 = vmatprep.subr.mxu0 0.0
  %801 = vmatpush1.msra.mxu0 0.0
  %802 = vmatprep.subr.mxu0 0.0
  %803 = vmatpush1.msra.mxu0 0.0
  %804 = vmatprep.subr.mxu0 0.0
  %805 = vmatpush1.msra.mxu0 0.0
  %806 = vmatprep.subr.mxu0 0.0
  %807 = vmatpush1.msra.mxu0 0.0
  %808 = vmatprep.subr.mxu0 0.0
  %809 = vmatpush1.msra.mxu0 0.0
  %810 = vmatprep.mubr.f32.mxu0 0.0
  %811 = vmatmul.mubr.f32.gmra.mrb[0].mxu0 %v744
  %v812 = vpop.f32.mrb[0].mxu0
  %v813 = vadd.f32 0.0, %v812
  %v814 = vpop.f32.mrb[0].mxu0
  %v815 = vadd.f32 0.0, %v814
  %816 = vdwg.mxu0
  %817 = vmatprep.subr.mxu0 0.0
  %818 = vmatpush1.msra.mxu0 %v28
  %819 = vmatprep.subr.mxu0 0.0
  %820 = vmatpush1.msra.mxu0 %v31
  %821 = vmatprep.subr.mxu0 0.0
  %822 = vmatpush1.msra.mxu0 %v34
  %823 = vmatprep.subr.mxu0 0.0
  %824 = vmatpush1.msra.mxu0 %v37
  %825 = vmatprep.subr.mxu0 0.0
  %826 = vmatpush1.msra.mxu0 %v40
  %827 = vmatprep.subr.mxu0 0.0
  %828 = vmatpush1.msra.mxu0 %v43
  %829 = vmatprep.subr.mxu0 0.0
  %830 = vmatpush1.msra.mxu0 %v46
  %831 = vmatprep.subr.mxu0 0.0
  %832 = vmatpush1.msra.mxu0 %v49
  %833 = vmatprep.subr.mxu0 0.0
  %834 = vmatpush1.msra.mxu0 0.0
  %835 = vmatprep.subr.mxu0 0.0
  %836 = vmatpush1.msra.mxu0 0.0
  %837 = vmatprep.subr.mxu0 0.0
  %838 = vmatpush1.msra.mxu0 0.0
  %839 = vmatprep.subr.mxu0 0.0
  %840 = vmatpush1.msra.mxu0 0.0
  %841 = vmatprep.subr.mxu0 0.0
  %842 = vmatpush1.msra.mxu0 0.0
  %843 = vmatprep.subr.mxu0 0.0
  %844 = vmatpush1.msra.mxu0 0.0
  %845 = vmatprep.subr.mxu0 0.0
  %846 = vmatpush1.msra.mxu0 0.0
  %847 = vmatprep.subr.mxu0 0.0
  %848 = vmatpush1.msra.mxu0 0.0
  %849 = vmatprep.subr.mxu0 0.0
  %850 = vmatpush1.msra.mxu0 0.0
  %851 = vmatprep.subr.mxu0 0.0
  %852 = vmatpush1.msra.mxu0 0.0
  %853 = vmatprep.subr.mxu0 0.0
  %854 = vmatpush1.msra.mxu0 0.0
  %855 = vmatprep.subr.mxu0 0.0
  %856 = vmatpush1.msra.mxu0 0.0
  %857 = vmatprep.subr.mxu0 0.0
  %858 = vmatpush1.msra.mxu0 0.0
  %859 = vmatprep.subr.mxu0 0.0
  %860 = vmatpush1.msra.mxu0 0.0
  %861 = vmatprep.subr.mxu0 0.0
  %862 = vmatpush1.msra.mxu0 0.0
  %863 = vmatprep.subr.mxu0 0.0
  %864 = vmatpush1.msra.mxu0 0.0
  %865 = vmatprep.subr.mxu0 0.0
  %866 = vmatpush1.msra.mxu0 0.0
  %867 = vmatprep.subr.mxu0 0.0
  %868 = vmatpush1.msra.mxu0 0.0
  %869 = vmatprep.subr.mxu0 0.0
  %870 = vmatpush1.msra.mxu0 0.0
  %871 = vmatprep.subr.mxu0 0.0
  %872 = vmatpush1.msra.mxu0 0.0
  %873 = vmatprep.subr.mxu0 0.0
  %874 = vmatpush1.msra.mxu0 0.0
  %875 = vmatprep.subr.mxu0 0.0
  %876 = vmatpush1.msra.mxu0 0.0
  %877 = vmatprep.subr.mxu0 0.0
  %878 = vmatpush1.msra.mxu0 0.0
  %879 = vmatprep.subr.mxu0 0.0
  %880 = vmatpush1.msra.mxu0 0.0
  %881 = vmatprep.mubr.f32.mxu0 0.0
  %882 = vmatmul.mubr.f32.gmra.mrb[0].mxu0 %v744
  %v883 = vpop.f32.mrb[0].mxu0
  %v884 = vadd.f32 0.0, %v883
  %v885 = vpop.f32.mrb[0].mxu0
  %886 = vdwg.mxu0
  %v888 = vcombine.high %v741, %v741
  %v893 = vrot.slane %v813, 4
  %v894 = vrot.slane %v815, 4
  %v895 = vrot.slane %v884, 4
  %v899 = vsel %vm214, %v741, %v893
  %v900 = vsel %vm214, %v888, %v894
  %v901 = vsel %vm214, %v742, %v895
  %v902 = vsel %vm218, %v901, 0.0
  %906 = vrot.lane.b32.xlu0 %v899, 127
  %v907 = vpop.permute.xlu0 %906
  %908 = vrot.lane.b32.xlu0 %v900, 127
  %v909 = vpop.permute.xlu0 %908
  %910 = vrot.lane.b32.xlu0 %v902, 127
  %v911 = vpop.permute.xlu0 %910
  %v912 = vsel %vm229, %v907, %v909
  %v913 = vsel %vm229, %v909, %v911
  %917 = vrot.lane.b32.xlu0 %v899, 126
  %v918 = vpop.permute.xlu0 %917
  %919 = vrot.lane.b32.xlu0 %v900, 126
  %v920 = vpop.permute.xlu0 %919
  %921 = vrot.lane.b32.xlu0 %v902, 126
  %v922 = vpop.permute.xlu0 %921
  %v923 = vsel %vm241, %v918, %v920
  %v924 = vsel %vm241, %v920, %v922
  %928 = vrot.lane.b32.xlu0 %v899, 110
  %v929 = vpop.permute.xlu0 %928
  %930 = vrot.lane.b32.xlu0 %v900, 110
  %v931 = vpop.permute.xlu0 %930
  %932 = vrot.lane.b32.xlu0 %v902, 110
  %v933 = vpop.permute.xlu0 %932
  %v934 = vsel %vm253, %v929, %v931
  %v935 = vsel %vm253, %v931, %v933
  %939 = vrot.lane.b32.xlu0 %v899, 109
  %v940 = vpop.permute.xlu0 %939
  %941 = vrot.lane.b32.xlu0 %v900, 109
  %v942 = vpop.permute.xlu0 %941
  %943 = vrot.lane.b32.xlu0 %v902, 109
  %v944 = vpop.permute.xlu0 %943
  %v945 = vsel %vm265, %v940, %v942
  %v946 = vsel %vm265, %v942, %v944
  %950 = vrot.lane.b32.xlu0 %v899, 108
  %v951 = vpop.permute.xlu0 %950
  %952 = vrot.lane.b32.xlu0 %v900, 108
  %v953 = vpop.permute.xlu0 %952
  %954 = vrot.lane.b32.xlu0 %v902, 108
  %v955 = vpop.permute.xlu0 %954
  %v956 = vsel %vm277, %v951, %v953
  %v957 = vsel %vm277, %v953, %v955
  %961 = vrot.lane.b32.xlu0 %v899, 92
  %v962 = vpop.permute.xlu0 %961
  %963 = vrot.lane.b32.xlu0 %v900, 92
  %v964 = vpop.permute.xlu0 %963
  %965 = vrot.lane.b32.xlu0 %v902, 92
  %v966 = vpop.permute.xlu0 %965
  %v967 = vsel %vm289, %v962, %v964
  %v968 = vsel %vm289, %v964, %v966
  %972 = vrot.lane.b32.xlu0 %v899, 91
  %v973 = vpop.permute.xlu0 %972
  %974 = vrot.lane.b32.xlu0 %v900, 91
  %v975 = vpop.permute.xlu0 %974
  %976 = vrot.lane.b32.xlu0 %v902, 91
  %v977 = vpop.permute.xlu0 %976
  %v978 = vsel %vm301, %v973, %v975
  %v979 = vsel %vm301, %v975, %v977
  %983 = vrot.lane.b32.xlu0 %v899, 90
  %v984 = vpop.permute.xlu0 %983
  %985 = vrot.lane.b32.xlu0 %v900, 90
  %v986 = vpop.permute.xlu0 %985
  %987 = vrot.lane.b32.xlu0 %v902, 90
  %v988 = vpop.permute.xlu0 %987
  %v989 = vsel %vm313, %v984, %v986
  %v990 = vsel %vm313, %v986, %v988
  %994 = vmatprep.subr.mxu0 %v900
  %995 = vmatpush1.msra.mxu0 %v899
  %996 = vmatprep.subr.mxu0 %v913
  %997 = vmatpush1.msra.mxu0 %v912
  %998 = vmatprep.subr.mxu0 %v924
  %999 = vmatpush1.msra.mxu0 %v923
  %1000 = vmatprep.subr.mxu0 %v935
  %1001 = vmatpush1.msra.mxu0 %v934
  %1002 = vmatprep.subr.mxu0 %v946
  %1003 = vmatpush1.msra.mxu0 %v945
  %1004 = vmatprep.subr.mxu0 %v957
  %1005 = vmatpush1.msra.mxu0 %v956
  %1006 = vmatprep.subr.mxu0 %v968
  %1007 = vmatpush1.msra.mxu0 %v967
  %1008 = vmatprep.subr.mxu0 %v979
  %1009 = vmatpush1.msra.mxu0 %v978
  %1010 = vmatprep.subr.mxu0 %v990
  %1011 = vmatpush1.msra.mxu0 %v989
  %1012 = vmatprep.subr.mxu0 0.0
  %1013 = vmatpush1.msra.mxu0 0.0
  %1014 = vmatprep.subr.mxu0 0.0
  %1015 = vmatpush1.msra.mxu0 0.0
  %1016 = vmatprep.subr.mxu0 0.0
  %1017 = vmatpush1.msra.mxu0 0.0
  %1018 = vmatprep.subr.mxu0 0.0
  %1019 = vmatpush1.msra.mxu0 0.0
  %1020 = vmatprep.subr.mxu0 0.0
  %1021 = vmatpush1.msra.mxu0 0.0
  %1022 = vmatprep.subr.mxu0 0.0
  %1023 = vmatpush1.msra.mxu0 0.0
  %1024 = vmatprep.subr.mxu0 0.0
  %1025 = vmatpush1.msra.mxu0 0.0
  %1026 = vmatprep.subr.mxu0 0.0
  %1027 = vmatpush1.msra.mxu0 0.0
  %1028 = vmatprep.subr.mxu0 0.0
  %1029 = vmatpush1.msra.mxu0 0.0
  %1030 = vmatprep.subr.mxu0 0.0
  %1031 = vmatpush1.msra.mxu0 0.0
  %1032 = vmatprep.subr.mxu0 0.0
  %1033 = vmatpush1.msra.mxu0 0.0
  %1034 = vmatprep.subr.mxu0 0.0
  %1035 = vmatpush1.msra.mxu0 0.0
  %1036 = vmatprep.subr.mxu0 0.0
  %1037 = vmatpush1.msra.mxu0 0.0
  %1038 = vmatprep.subr.mxu0 0.0
  %1039 = vmatpush1.msra.mxu0 0.0
  %1040 = vmatprep.subr.mxu0 0.0
  %1041 = vmatpush1.msra.mxu0 0.0
  %1042 = vmatprep.subr.mxu0 0.0
  %1043 = vmatpush1.msra.mxu0 0.0
  %1044 = vmatprep.subr.mxu0 0.0
  %1045 = vmatpush1.msra.mxu0 0.0
  %1046 = vmatprep.subr.mxu0 0.0
  %1047 = vmatpush1.msra.mxu0 0.0
  %1048 = vmatprep.subr.mxu0 0.0
  %1049 = vmatpush1.msra.mxu0 0.0
  %1050 = vmatprep.subr.mxu0 0.0
  %1051 = vmatpush1.msra.mxu0 0.0
  %1052 = vmatprep.subr.mxu0 0.0
  %1053 = vmatpush1.msra.mxu0 0.0
  %1054 = vmatprep.subr.mxu0 0.0
  %1055 = vmatpush1.msra.mxu0 0.0
  %1056 = vmatprep.subr.mxu0 0.0
  %1057 = vmatpush1.msra.mxu0 0.0
  %1058 = vmatprep.mubr.f32.mxu0 0.0
  %1059 = vmatmul.mubr.f32.gmra.mrb[0].mxu0 %v326
  %v1060 = vpop.f32.mrb[0].mxu0
  %v1061 = vadd.f32 %v322, %v1060
  %v1062 = vpop.f32.mrb[0].mxu0
  %v1063 = vadd.f32 %v322, %v1062
  %1064 = vdwg.mxu0
  %1065 = vmatprep.subr.mxu0 0.0
  %1066 = vmatpush1.msra.mxu0 %v902
  %1067 = vmatprep.subr.mxu0 0.0
  %1068 = vmatpush1.msra.mxu0 %v911
  %1069 = vmatprep.subr.mxu0 0.0
  %1070 = vmatpush1.msra.mxu0 %v922
  %1071 = vmatprep.subr.mxu0 0.0
  %1072 = vmatpush1.msra.mxu0 %v933
  %1073 = vmatprep.subr.mxu0 0.0
  %1074 = vmatpush1.msra.mxu0 %v944
  %1075 = vmatprep.subr.mxu0 0.0
  %1076 = vmatpush1.msra.mxu0 %v955
  %1077 = vmatprep.subr.mxu0 0.0
  %1078 = vmatpush1.msra.mxu0 %v966
  %1079 = vmatprep.subr.mxu0 0.0
  %1080 = vmatpush1.msra.mxu0 %v977
  %1081 = vmatprep.subr.mxu0 0.0
  %1082 = vmatpush1.msra.mxu0 %v988
  %1083 = vmatprep.subr.mxu0 0.0
  %1084 = vmatpush1.msra.mxu0 0.0
  %1085 = vmatprep.subr.mxu0 0.0
  %1086 = vmatpush1.msra.mxu0 0.0
  %1087 = vmatprep.subr.mxu0 0.0
  %1088 = vmatpush1.msra.mxu0 0.0
  %1089 = vmatprep.subr.mxu0 0.0
  %1090 = vmatpush1.msra.mxu0 0.0
  %1091 = vmatprep.subr.mxu0 0.0
  %1092 = vmatpush1.msra.mxu0 0.0
  %1093 = vmatprep.subr.mxu0 0.0
  %1094 = vmatpush1.msra.mxu0 0.0
  %1095 = vmatprep.subr.mxu0 0.0
  %1096 = vmatpush1.msra.mxu0 0.0
  %1097 = vmatprep.subr.mxu0 0.0
  %1098 = vmatpush1.msra.mxu0 0.0
  %1099 = vmatprep.subr.mxu0 0.0
  %1100 = vmatpush1.msra.mxu0 0.0
  %1101 = vmatprep.subr.mxu0 0.0
  %1102 = vmatpush1.msra.mxu0 0.0
  %1103 = vmatprep.subr.mxu0 0.0
  %1104 = vmatpush1.msra.mxu0 0.0
  %1105 = vmatprep.subr.mxu0 0.0
  %1106 = vmatpush1.msra.mxu0 0.0
  %1107 = vmatprep.subr.mxu0 0.0
  %1108 = vmatpush1.msra.mxu0 0.0
  %1109 = vmatprep.subr.mxu0 0.0
  %1110 = vmatpush1.msra.mxu0 0.0
  %1111 = vmatprep.subr.mxu0 0.0
  %1112 = vmatpush1.msra.mxu0 0.0
  %1113 = vmatprep.subr.mxu0 0.0
  %1114 = vmatpush1.msra.mxu0 0.0
  %1115 = vmatprep.subr.mxu0 0.0
  %1116 = vmatpush1.msra.mxu0 0.0
  %1117 = vmatprep.subr.mxu0 0.0
  %1118 = vmatpush1.msra.mxu0 0.0
  %1119 = vmatprep.subr.mxu0 0.0
  %1120 = vmatpush1.msra.mxu0 0.0
  %1121 = vmatprep.subr.mxu0 0.0
  %1122 = vmatpush1.msra.mxu0 0.0
  %1123 = vmatprep.subr.mxu0 0.0
  %1124 = vmatpush1.msra.mxu0 0.0
  %1125 = vmatprep.subr.mxu0 0.0
  %1126 = vmatpush1.msra.mxu0 0.0
  %1127 = vmatprep.subr.mxu0 0.0
  %1128 = vmatpush1.msra.mxu0 0.0
  %1129 = vmatprep.mubr.f32.mxu0 0.0
  %1130 = vmatmul.mubr.f32.gmra.mrb[0].mxu0 %v326
  %v1131 = vpop.f32.mrb[0].mxu0
  %v1132 = vadd.f32 %v322, %v1131
  %v1133 = vpop.f32.mrb[0].mxu0
  %1134 = vdwg.mxu0
  %v1135 = vmax.f32 %v1061, 0.0
  %v1136 = vmax.f32 %v1063, 0.0
  %v1137 = vmax.f32 %v1132, 0.0
  %v1138 = vsel %vm218, %v1137, 0.0
  %v1142 = vrot.slane %v1135, 4
  %v1143 = vrot.slane %v1136, 4
  %v1144 = vrot.slane %v1138, 4
  %1145 = vrot.lane.b32.xlu0 %v1142, 127
  %v1146 = vpop.permute.xlu0 %1145
  %1147 = vrot.lane.b32.xlu0 %v1143, 127
  %v1148 = vpop.permute.xlu0 %1147
  %1149 = vrot.lane.b32.xlu0 %v1144, 127
  %v1150 = vpop.permute.xlu0 %1149
  %v1151 = vsel %vm229, %v1146, %v1148
  %v1152 = vsel %vm229, %v1148, %v1150
  %1156 = vrot.lane.b32.xlu0 %v1135, 126
  %v1157 = vpop.permute.xlu0 %1156
  %1158 = vrot.lane.b32.xlu0 %v1136, 126
  %v1159 = vpop.permute.xlu0 %1158
  %1160 = vrot.lane.b32.xlu0 %v1138, 126
  %v1161 = vpop.permute.xlu0 %1160
  %v1162 = vsel %vm241, %v1157, %v1159
  %v1163 = vsel %vm241, %v1159, %v1161
  %1167 = vrot.lane.b32.xlu0 %v1142, 110
  %v1168 = vpop.permute.xlu0 %1167
  %1169 = vrot.lane.b32.xlu0 %v1143, 110
  %v1170 = vpop.permute.xlu0 %1169
  %1171 = vrot.lane.b32.xlu0 %v1144, 110
  %v1172 = vpop.permute.xlu0 %1171
  %v1173 = vsel %vm253, %v1168, %v1170
  %v1174 = vsel %vm253, %v1170, %v1172
  %1178 = vrot.lane.b32.xlu0 %v1135, 109
  %v1179 = vpop.permute.xlu0 %1178
  %1180 = vrot.lane.b32.xlu0 %v1136, 109
  %v1181 = vpop.permute.xlu0 %1180
  %1182 = vrot.lane.b32.xlu0 %v1138, 109
  %v1183 = vpop.permute.xlu0 %1182
  %v1184 = vsel %vm265, %v1179, %v1181
  %v1185 = vsel %vm265, %v1181, %v1183
  %1189 = vrot.lane.b32.xlu0 %v1142, 108
  %v1190 = vpop.permute.xlu0 %1189
  %1191 = vrot.lane.b32.xlu0 %v1143, 108
  %v1192 = vpop.permute.xlu0 %1191
  %1193 = vrot.lane.b32.xlu0 %v1144, 108
  %v1194 = vpop.permute.xlu0 %1193
  %v1195 = vsel %vm277, %v1190, %v1192
  %v1196 = vsel %vm277, %v1192, %v1194
  %1200 = vrot.lane.b32.xlu0 %v1135, 92
  %v1201 = vpop.permute.xlu0 %1200
  %1202 = vrot.lane.b32.xlu0 %v1136, 92
  %v1203 = vpop.permute.xlu0 %1202
  %1204 = vrot.lane.b32.xlu0 %v1138, 92
  %v1205 = vpop.permute.xlu0 %1204
  %v1206 = vsel %vm289, %v1201, %v1203
  %v1207 = vsel %vm289, %v1203, %v1205
  %1211 = vrot.lane.b32.xlu0 %v1142, 91
  %v1212 = vpop.permute.xlu0 %1211
  %1213 = vrot.lane.b32.xlu0 %v1143, 91
  %v1214 = vpop.permute.xlu0 %1213
  %1215 = vrot.lane.b32.xlu0 %v1144, 91
  %v1216 = vpop.permute.xlu0 %1215
  %v1217 = vsel %vm301, %v1212, %v1214
  %v1218 = vsel %vm301, %v1214, %v1216
  %1222 = vrot.lane.b32.xlu0 %v1135, 90
  %v1223 = vpop.permute.xlu0 %1222
  %1224 = vrot.lane.b32.xlu0 %v1136, 90
  %v1225 = vpop.permute.xlu0 %1224
  %1226 = vrot.lane.b32.xlu0 %v1138, 90
  %v1227 = vpop.permute.xlu0 %1226
  %v1228 = vsel %vm313, %v1223, %v1225
  %v1229 = vsel %vm313, %v1225, %v1227
  %v1230 = vsel %vm214, %v1135, %v1151
  %v1231 = vsel %vm214, %v1136, %v1152
  %v1232 = vsel %vm214, %v1138, %v1150
  %v1233 = vsel %vm214, %v1162, %v1173
  %v1234 = vsel %vm214, %v1163, %v1174
  %v1235 = vsel %vm214, %v1161, %v1172
  %v1236 = vsel %vm214, %v1184, %v1195
  %v1237 = vsel %vm214, %v1185, %v1196
  %v1238 = vsel %vm214, %v1183, %v1194
  %v1239 = vsel %vm214, %v1206, %v1217
  %v1240 = vsel %vm214, %v1207, %v1218
  %v1241 = vsel %vm214, %v1205, %v1216
  %v1242 = vsel %vm214, %v1228, 0
  %v1244 = vsel %vm214, %v1229, 0
  %v1246 = vsel %vm214, %v1227, 0
  %1248 = vmatprep.subr.mxu0 %v1231
  %1249 = vmatpush1.msra.mxu0 %v1230
  %1250 = vmatprep.subr.mxu0 %v1234
  %1251 = vmatpush1.msra.mxu0 %v1233
  %1252 = vmatprep.subr.mxu0 %v1237
  %1253 = vmatpush1.msra.mxu0 %v1236
  %1254 = vmatprep.subr.mxu0 %v1240
  %1255 = vmatpush1.msra.mxu0 %v1239
  %1256 = vmatprep.subr.mxu0 %v1244
  %1257 = vmatpush1.msra.mxu0 %v1242
  %1258 = vmatprep.subr.mxu0 0.0
  %1259 = vmatpush1.msra.mxu0 0.0
  %1260 = vmatprep.subr.mxu0 0.0
  %1261 = vmatpush1.msra.mxu0 0.0
  %1262 = vmatprep.subr.mxu0 0.0
  %1263 = vmatpush1.msra.mxu0 0.0
  %1264 = vmatprep.subr.mxu0 0.0
  %1265 = vmatpush1.msra.mxu0 0.0
  %1266 = vmatprep.subr.mxu0 0.0
  %1267 = vmatpush1.msra.mxu0 0.0
  %1268 = vmatprep.subr.mxu0 0.0
  %1269 = vmatpush1.msra.mxu0 0.0
  %1270 = vmatprep.subr.mxu0 0.0
  %1271 = vmatpush1.msra.mxu0 0.0
  %1272 = vmatprep.subr.mxu0 0.0
  %1273 = vmatpush1.msra.mxu0 0.0
  %1274 = vmatprep.subr.mxu0 0.0
  %1275 = vmatpush1.msra.mxu0 0.0
  %1276 = vmatprep.subr.mxu0 0.0
  %1277 = vmatpush1.msra.mxu0 0.0
  %1278 = vmatprep.subr.mxu0 0.0
  %1279 = vmatpush1.msra.mxu0 0.0
  %1280 = vmatprep.subr.mxu0 0.0
  %1281 = vmatpush1.msra.mxu0 0.0
  %1282 = vmatprep.subr.mxu0 0.0
  %1283 = vmatpush1.msra.mxu0 0.0
  %1284 = vmatprep.subr.mxu0 0.0
  %1285 = vmatpush1.msra.mxu0 0.0
  %1286 = vmatprep.subr.mxu0 0.0
  %1287 = vmatpush1.msra.mxu0 0.0
  %1288 = vmatprep.subr.mxu0 0.0
  %1289 = vmatpush1.msra.mxu0 0.0
  %1290 = vmatprep.subr.mxu0 0.0
  %1291 = vmatpush1.msra.mxu0 0.0
  %1292 = vmatprep.subr.mxu0 0.0
  %1293 = vmatpush1.msra.mxu0 0.0
  %1294 = vmatprep.subr.mxu0 0.0
  %1295 = vmatpush1.msra.mxu0 0.0
  %1296 = vmatprep.subr.mxu0 0.0
  %1297 = vmatpush1.msra.mxu0 0.0
  %1298 = vmatprep.subr.mxu0 0.0
  %1299 = vmatpush1.msra.mxu0 0.0
  %1300 = vmatprep.subr.mxu0 0.0
  %1301 = vmatpush1.msra.mxu0 0.0
  %1302 = vmatprep.subr.mxu0 0.0
  %1303 = vmatpush1.msra.mxu0 0.0
  %1304 = vmatprep.subr.mxu0 0.0
  %1305 = vmatpush1.msra.mxu0 0.0
  %1306 = vmatprep.subr.mxu0 0.0
  %1307 = vmatpush1.msra.mxu0 0.0
  %1308 = vmatprep.subr.mxu0 0.0
  %1309 = vmatpush1.msra.mxu0 0.0
  %1310 = vmatprep.subr.mxu0 0.0
  %1311 = vmatpush1.msra.mxu0 0.0
  %1312 = vmatprep.mubr.f32.mxu0 0.0
  %1313 = vmatmul.mubr.f32.gmra.mrb[0].mxu0 %v583
  %v1314 = vpop.f32.mrb[0].mxu0
  %v1315 = vadd.f32 %v579, %v1314
  %v1316 = vpop.f32.mrb[0].mxu0
  %v1317 = vadd.f32 %v579, %v1316
  %1318 = vdwg.mxu0
  %1319 = vmatprep.subr.mxu0 0.0
  %1320 = vmatpush1.msra.mxu0 %v1232
  %1321 = vmatprep.subr.mxu0 0.0
  %1322 = vmatpush1.msra.mxu0 %v1235
  %1323 = vmatprep.subr.mxu0 0.0
  %1324 = vmatpush1.msra.mxu0 %v1238
  %1325 = vmatprep.subr.mxu0 0.0
  %1326 = vmatpush1.msra.mxu0 %v1241
  %1327 = vmatprep.subr.mxu0 0.0
  %1328 = vmatpush1.msra.mxu0 %v1246
  %1329 = vmatprep.subr.mxu0 0.0
  %1330 = vmatpush1.msra.mxu0 0.0
  %1331 = vmatprep.subr.mxu0 0.0
  %1332 = vmatpush1.msra.mxu0 0.0
  %1333 = vmatprep.subr.mxu0 0.0
  %1334 = vmatpush1.msra.mxu0 0.0
  %1335 = vmatprep.subr.mxu0 0.0
  %1336 = vmatpush1.msra.mxu0 0.0
  %1337 = vmatprep.subr.mxu0 0.0
  %1338 = vmatpush1.msra.mxu0 0.0
  %1339 = vmatprep.subr.mxu0 0.0
  %1340 = vmatpush1.msra.mxu0 0.0
  %1341 = vmatprep.subr.mxu0 0.0
  %1342 = vmatpush1.msra.mxu0 0.0
  %1343 = vmatprep.subr.mxu0 0.0
  %1344 = vmatpush1.msra.mxu0 0.0
  %1345 = vmatprep.subr.mxu0 0.0
  %1346 = vmatpush1.msra.mxu0 0.0
  %1347 = vmatprep.subr.mxu0 0.0
  %1348 = vmatpush1.msra.mxu0 0.0
  %1349 = vmatprep.subr.mxu0 0.0
  %1350 = vmatpush1.msra.mxu0 0.0
  %1351 = vmatprep.subr.mxu0 0.0
  %1352 = vmatpush1.msra.mxu0 0.0
  %1353 = vmatprep.subr.mxu0 0.0
  %1354 = vmatpush1.msra.mxu0 0.0
  %1355 = vmatprep.subr.mxu0 0.0
  %1356 = vmatpush1.msra.mxu0 0.0
  %1357 = vmatprep.subr.mxu0 0.0
  %1358 = vmatpush1.msra.mxu0 0.0
  %1359 = vmatprep.subr.mxu0 0.0
  %1360 = vmatpush1.msra.mxu0 0.0
  %1361 = vmatprep.subr.mxu0 0.0
  %1362 = vmatpush1.msra.mxu0 0.0
  %1363 = vmatprep.subr.mxu0 0.0
  %1364 = vmatpush1.msra.mxu0 0.0
  %1365 = vmatprep.subr.mxu0 0.0
  %1366 = vmatpush1.msra.mxu0 0.0
  %1367 = vmatprep.subr.mxu0 0.0
  %1368 = vmatpush1.msra.mxu0 0.0
  %1369 = vmatprep.subr.mxu0 0.0
  %1370 = vmatpush1.msra.mxu0 0.0
  %1371 = vmatprep.subr.mxu0 0.0
  %1372 = vmatpush1.msra.mxu0 0.0
  %1373 = vmatprep.subr.mxu0 0.0
  %1374 = vmatpush1.msra.mxu0 0.0
  %1375 = vmatprep.subr.mxu0 0.0
  %1376 = vmatpush1.msra.mxu0 0.0
  %1377 = vmatprep.subr.mxu0 0.0
  %1378 = vmatpush1.msra.mxu0 0.0
  %1379 = vmatprep.subr.mxu0 0.0
  %1380 = vmatpush1.msra.mxu0 0.0
  %1381 = vmatprep.subr.mxu0 0.0
  %1382 = vmatpush1.msra.mxu0 0.0
  %1383 = vmatprep.mubr.f32.mxu0 0.0
  %1384 = vmatmul.mubr.f32.gmra.mrb[0].mxu0 %v583
  %v1385 = vpop.f32.mrb[0].mxu0
  %v1386 = vadd.f32 %v579, %v1385
  %v1387 = vpop.f32.mrb[0].mxu0
  %1388 = vdwg.mxu0
  %v1389 = vmax.f32 %v1315, 0.0
  %v1390 = vmax.f32 %v1317, 0.0
  %v1391 = vmax.f32 %v1386, 0.0
  %s1392 = scalar_lea.vmem %s7, 24
  %1393 = vst [vmem:[%s1392] sm:$0xff] %v1389
  %1394 = vst [vmem:[%s1392 + $0x8] sm:$0xff] %v1390
  %1395 = vst.msk [vmem:[%s1392 + $0x10] sm:$0xff] %vm218, %v1391
  // Predicated region
  $region30: #{upconv_forward.1} parent=0 // pred_check
    _
  $region31: #{upconv_forward.1} parent=0 // pred_check_branch
    %1397 = sbr.rel (0) target = $region33
  $region32: #{upconv_forward.1} parent=0 // pred_region
    _
  $region33: #{upconv_forward.1} parent=0 // pred_fallthru
    _
  // Predicated region
  $region34: #{upconv_forward.1} parent=0 // pred_check
    _
  $region35: #{upconv_forward.1} parent=0 // pred_check_branch
    %1399 = sbr.rel (0) target = $region37
  $region36: #{upconv_forward.1} parent=0 // pred_region
    _
  $region37: #{upconv_forward.1} parent=0 // pred_fallthru
    _

</llo_original>
